<compile_context>
chip_gen: v5e
topology: v5e:2x2
jax: 0.10.0
libtpu: 0.0.40
codegen_flags: <defaults>
</compile_context>

<pallas_src>
from functools import partial

import jax
import jax.numpy as jnp
from jax import lax
from jax.experimental import pallas as pl
from jax.experimental.pallas import tpu as pltpu


def self_attention_kernel(x_ref, wqkv_ref, wout_ref, bout_ref, o_ref, *,
                          heads, scale, block_b):
    _, n, c = x_ref.shape
    dh = c // heads

    # Flatten the batch block so the projection matmuls see block_b*N rows
    # (better MXU occupancy than N rows per matmul).
    x = x_ref[...].reshape(block_b * n, c).astype(jnp.bfloat16)

    # QKV projection: bf16 operands, f32 accumulation on the MXU.
    qkv = jnp.dot(x, wqkv_ref[...], preferred_element_type=jnp.float32)  # (Bb*N, 3C)

    for b in range(block_b):                      # static unroll over batch block
        qkv_b = qkv[b * n:(b + 1) * n]            # (N, 3C) static sublane slice
        yb = jnp.zeros((n, c), jnp.float32)       # fused output-projection accumulator

        for h in range(heads):                    # static unroll over heads
            lo = h * dh
            # Fold the attention scale into q (N*dh elements vs N*N for att).
            qh = (qkv_b[:, lo:lo + dh] * scale).astype(jnp.bfloat16)          # (N, dh)
            kh = qkv_b[:, c + lo:c + lo + dh].astype(jnp.bfloat16)            # (N, dh)
            vh = qkv_b[:, 2 * c + lo:2 * c + lo + dh].astype(jnp.bfloat16)    # (N, dh)

            # q @ k^T without materializing a transpose of k:
            # contract dim 1 of both operands directly on the MXU.
            att = lax.dot_general(
                qh, kh, (((1,), (1,)), ((), ())),
                preferred_element_type=jnp.float32)                           # (N, N)

            # Numerically stable softmax; division replaced by EUP approx recip.
            att = att - jnp.max(att, axis=-1, keepdims=True)
            p = jnp.exp(att)
            inv = pl.reciprocal(jnp.sum(p, axis=-1, keepdims=True), approx=True)
            p = (p * inv).astype(jnp.bfloat16)

            oh = jnp.dot(p, vh, preferred_element_type=jnp.float32)           # (N, dh)

            # Fused output projection per head (kills the head concat):
            #   y += o_h @ Wout^T[h*dh:(h+1)*dh, :]
            yb = yb + jnp.dot(oh.astype(jnp.bfloat16),
                              wout_ref[lo:lo + dh, :],
                              preferred_element_type=jnp.float32)             # (N, C)

        o_ref[b] = (yb + bout_ref[...]).astype(o_ref.dtype)


def _pick_block_b(B, N):
    """Largest batch block s.t. rows per projection stay modest and (for v7x's
    two TensorCores) the grid keeps >= 2 steps whenever B >= 2."""
    best = 1
    for cand in range(1, B + 1):
        if B % cand:
            continue
        if B >= 2 and B // cand < 2:
            continue
        if cand * N <= 256:
            best = cand
    return best


def self_attention(x, wqkv, wout, bout, *, heads=4, dim_head=32, block_b=None):
    """x: (B, N, C); wqkv: (3C, C); wout: (C, C); bout: (C,). Returns f32 (B, N, C)."""
    B, N, C = x.shape
    scale = dim_head ** (-0.5)                 # matches PyTorch: dim_head, not C // heads

    if block_b is None:
        block_b = _pick_block_b(B, N)
    assert B % block_b == 0, "batch must divide evenly into batch blocks"

    # Weights pre-transposed and pre-cast to bf16 (halves weight HBM/VMEM traffic,
    # bf16-native MXU); bias stays f32 and is added to the f32 accumulator.
    wqkv_t = wqkv.T.astype(jnp.bfloat16)       # (C, 3C)
    wout_t = wout.T.astype(jnp.bfloat16)       # (C, C)
    bout2 = bout.reshape(1, C).astype(jnp.float32)

    kernel = partial(self_attention_kernel, heads=heads, scale=scale,
                     block_b=block_b)

    return pl.pallas_call(
        kernel,
        out_shape=jax.ShapeDtypeStruct((B, N, C), jnp.float32),
        grid_spec=pltpu.PrefetchScalarGridSpec(
            num_scalar_prefetch=0,
            grid=(B // block_b,),
            in_specs=[
                pl.BlockSpec((block_b, N, C), lambda b: (b, 0, 0)),   # x batch block
                pl.BlockSpec((C, 3 * C), lambda b: (0, 0)),           # Wqkv^T (resident)
                pl.BlockSpec((C, C), lambda b: (0, 0)),               # Wout^T (resident)
                pl.BlockSpec((1, C), lambda b: (0, 0)),               # bias
            ],
            out_specs=pl.BlockSpec((block_b, N, C), lambda b: (b, 0, 0)),
        ),
        compiler_params=pltpu.CompilerParams(
            dimension_semantics=("parallel",)),
    )(x, wqkv_t, wout_t, bout2)


def self_attention_ref(x, wqkv, wout, bout, *, heads=4, dim_head=32):
    """Pure-JAX f32 reference mirroring the PyTorch forward."""
    B, N, C = x.shape
    scale = dim_head ** (-0.5)
    qkv = x @ wqkv.T                                # (B, N, 3C)
    q, k, v = jnp.split(qkv, 3, axis=-1)

    def to_heads(t):
        return t.reshape(B, N, heads, C // heads).transpose(0, 2, 1, 3)  # (B, H, N, dh)

    q, k, v = map(to_heads, (q, k, v))
    att = jnp.einsum('bhqd,bhkd->bhqk', q, k) * scale
    att = jax.nn.softmax(att, axis=-1)
    out = jnp.einsum('bhqk,bhkd->bhqd', att, v)     # (B, H, N, dh)
    out = out.transpose(0, 2, 1, 3).reshape(B, N, C)
    return out @ wout.T + bout


if __name__ == "__main__":
    B, N, C = 2, 64, 128       # batch, num_points, dim
    HEADS, DIM_HEAD = 4, 32    # module defaults (dim_head only sets the scale)

    key = jax.random.PRNGKey(0)
    kx, kw1, kw2, kb = jax.random.split(key, 4)

    x = jax.random.normal(kx, (B, N, C), dtype=jnp.float32)
    # Deterministic synthetic parameters (PyTorch shapes: weight = (out, in)).
    wqkv = jax.random.normal(kw1, (3 * C, C), dtype=jnp.float32) * 0.05
    wout = jax.random.normal(kw2, (C, C), dtype=jnp.float32) * 0.05
    bout = jax.random.normal(kb, (C,), dtype=jnp.float32) * 0.05

    y = self_attention(x, wqkv, wout, bout, heads=HEADS, dim_head=DIM_HEAD)
    y = jax.block_until_ready(y)

    y_ref = self_attention_ref(x, wqkv, wout, bout, heads=HEADS, dim_head=DIM_HEAD)
    assert y.shape == (B, N, C)
    # bf16 MXU operands (f32 accumulation) -> loosened tolerance vs f32 reference.
    assert jnp.allclose(y, y_ref, atol=3e-2, rtol=3e-2), "mismatch vs reference"

    print("KERNEL_OK")
</pallas_src>

<mosaic_0001>
module attributes {stable_mosaic.version = 11 : i64} {
  func.func @self_attention_kernel(%arg0: i32, %arg1: memref<1x64x128xf32, #tpu.memory_space<vmem>>, %arg2: memref<128x384xbf16, #tpu.memory_space<vmem>>, %arg3: memref<128x128xbf16, #tpu.memory_space<vmem>>, %arg4: memref<1x128xf32, #tpu.memory_space<vmem>>, %arg5: memref<1x64x128xf32, #tpu.memory_space<vmem>>) attributes {dimension_semantics = [#tpu.dimension_semantics<parallel>], iteration_bounds = array<i64: 2>, scalar_prefetch = 0 : i64, scratch_operands = 0 : i64, tpu.core_type = #tpu.core_type<tc>, window_params = [{transform_indices = @transform_0, window_bounds = array<i64: 1, 64, 128>}, {pipeline_mode = #tpu.pipeline_mode<synchronous>, transform_indices = @transform_1, window_bounds = array<i64: 128, 384>}, {pipeline_mode = #tpu.pipeline_mode<synchronous>, transform_indices = @transform_2, window_bounds = array<i64: 128, 128>}, {pipeline_mode = #tpu.pipeline_mode<synchronous>, transform_indices = @transform_3, window_bounds = array<i64: 1, 128>}, {transform_indices = @transform_4, window_bounds = array<i64: 1, 64, 128>}]} {
    %c0 = arith.constant 0 : index
    %c0_0 = arith.constant 0 : index
    %c0_1 = arith.constant 0 : index
    %0 = vector.load %arg1[%c0, %c0_0, %c0_1] : memref<1x64x128xf32, #tpu.memory_space<vmem>>, vector<1x64x128xf32>
    %1 = vector.shape_cast %0 : vector<1x64x128xf32> to vector<64x128xf32>
    %2 = arith.truncf %1 : vector<64x128xf32> to vector<64x128xbf16>
    %c0_2 = arith.constant 0 : index
    %c0_3 = arith.constant 0 : index
    %3 = vector.load %arg2[%c0_2, %c0_3] : memref<128x384xbf16, #tpu.memory_space<vmem>>, vector<128x384xbf16>
    %cst = arith.constant dense<0.000000e+00> : vector<64x384xf32>
    %4 = tpu.matmul %2, %3, %cst {dimension_numbers = #tpu.dot_dimension_numbers<[1], [0], [0], [1], [0, 0, 1, 1], [], []>} : vector<64x128xbf16>, vector<128x384xbf16>, vector<64x384xf32> -> vector<64x384xf32>
    %cst_4 = arith.constant 0.000000e+00 : f32
    %5 = vector.broadcast %cst_4 : f32 to vector<64x128xf32>
    %6 = vector.extract_strided_slice %4 {offsets = [0, 0], sizes = [64, 32], strides = [1, 1]} : vector<64x384xf32> to vector<64x32xf32>
    %cst_5 = arith.constant 0.176776692 : f32
    %7 = vector.broadcast %cst_5 : f32 to vector<64x32xf32>
    %8 = arith.mulf %6, %7 : vector<64x32xf32>
    %9 = arith.truncf %8 : vector<64x32xf32> to vector<64x32xbf16>
    %10 = vector.extract_strided_slice %4 {offsets = [0, 128], sizes = [64, 32], strides = [1, 1]} : vector<64x384xf32> to vector<64x32xf32>
    %11 = arith.truncf %10 : vector<64x32xf32> to vector<64x32xbf16>
    %12 = vector.extract_strided_slice %4 {offsets = [0, 256], sizes = [64, 32], strides = [1, 1]} : vector<64x384xf32> to vector<64x32xf32>
    %13 = arith.truncf %12 : vector<64x32xf32> to vector<64x32xbf16>
    %cst_6 = arith.constant dense<0.000000e+00> : vector<64x64xf32>
    %14 = tpu.matmul %9, %11, %cst_6 {dimension_numbers = #tpu.dot_dimension_numbers<[1], [1], [0], [0], [0, 0, 1, 0], [], []>} : vector<64x32xbf16>, vector<64x32xbf16>, vector<64x64xf32> -> vector<64x64xf32>
    %cst_7 = arith.constant dense<0xFF800000> : vector<64xf32>
    %15 = vector.multi_reduction <maximumf>, %14, %cst_7 [1] : vector<64x64xf32> to vector<64xf32>
    %16 = vector.shape_cast %15 : vector<64xf32> to vector<64x1xf32>
    %17 = vector.broadcast %16 : vector<64x1xf32> to vector<64x64xf32>
    %18 = arith.subf %14, %17 : vector<64x64xf32>
    %19 = math.exp %18 : vector<64x64xf32>
    %cst_8 = arith.constant dense<0.000000e+00> : vector<64xf32>
    %20 = vector.multi_reduction <add>, %19, %cst_8 [1] : vector<64x64xf32> to vector<64xf32>
    %21 = vector.shape_cast %20 : vector<64xf32> to vector<64x1xf32>
    %22 = tpu.reciprocal %21 {approx = true} : vector<64x1xf32> -> vector<64x1xf32>
    %23 = vector.broadcast %22 : vector<64x1xf32> to vector<64x64xf32>
    %24 = arith.mulf %19, %23 : vector<64x64xf32>
    %25 = arith.truncf %24 : vector<64x64xf32> to vector<64x64xbf16>
    %cst_9 = arith.constant dense<0.000000e+00> : vector<64x32xf32>
    %26 = tpu.matmul %25, %13, %cst_9 {dimension_numbers = #tpu.dot_dimension_numbers<[1], [0], [0], [1], [0, 0, 1, 1], [], []>} : vector<64x64xbf16>, vector<64x32xbf16>, vector<64x32xf32> -> vector<64x32xf32>
    %27 = arith.truncf %26 : vector<64x32xf32> to vector<64x32xbf16>
    %c0_10 = arith.constant 0 : index
    %c0_11 = arith.constant 0 : index
    %28 = vector.load %arg3[%c0_10, %c0_11] : memref<128x128xbf16, #tpu.memory_space<vmem>>, vector<32x128xbf16>
    %cst_12 = arith.constant dense<0.000000e+00> : vector<64x128xf32>
    %29 = tpu.matmul %27, %28, %cst_12 {dimension_numbers = #tpu.dot_dimension_numbers<[1], [0], [0], [1], [0, 0, 1, 1], [], []>} : vector<64x32xbf16>, vector<32x128xbf16>, vector<64x128xf32> -> vector<64x128xf32>
    %30 = arith.addf %5, %29 : vector<64x128xf32>
    %31 = vector.extract_strided_slice %4 {offsets = [0, 32], sizes = [64, 32], strides = [1, 1]} : vector<64x384xf32> to vector<64x32xf32>
    %cst_13 = arith.constant 0.176776692 : f32
    %32 = vector.broadcast %cst_13 : f32 to vector<64x32xf32>
    %33 = arith.mulf %31, %32 : vector<64x32xf32>
    %34 = arith.truncf %33 : vector<64x32xf32> to vector<64x32xbf16>
    %35 = vector.extract_strided_slice %4 {offsets = [0, 160], sizes = [64, 32], strides = [1, 1]} : vector<64x384xf32> to vector<64x32xf32>
    %36 = arith.truncf %35 : vector<64x32xf32> to vector<64x32xbf16>
    %37 = vector.extract_strided_slice %4 {offsets = [0, 288], sizes = [64, 32], strides = [1, 1]} : vector<64x384xf32> to vector<64x32xf32>
    %38 = arith.truncf %37 : vector<64x32xf32> to vector<64x32xbf16>
    %cst_14 = arith.constant dense<0.000000e+00> : vector<64x64xf32>
    %39 = tpu.matmul %34, %36, %cst_14 {dimension_numbers = #tpu.dot_dimension_numbers<[1], [1], [0], [0], [0, 0, 1, 0], [], []>} : vector<64x32xbf16>, vector<64x32xbf16>, vector<64x64xf32> -> vector<64x64xf32>
    %cst_15 = arith.constant dense<0xFF800000> : vector<64xf32>
    %40 = vector.multi_reduction <maximumf>, %39, %cst_15 [1] : vector<64x64xf32> to vector<64xf32>
    %41 = vector.shape_cast %40 : vector<64xf32> to vector<64x1xf32>
    %42 = vector.broadcast %41 : vector<64x1xf32> to vector<64x64xf32>
    %43 = arith.subf %39, %42 : vector<64x64xf32>
    %44 = math.exp %43 : vector<64x64xf32>
    %cst_16 = arith.constant dense<0.000000e+00> : vector<64xf32>
    %45 = vector.multi_reduction <add>, %44, %cst_16 [1] : vector<64x64xf32> to vector<64xf32>
    %46 = vector.shape_cast %45 : vector<64xf32> to vector<64x1xf32>
    %47 = tpu.reciprocal %46 {approx = true} : vector<64x1xf32> -> vector<64x1xf32>
    %48 = vector.broadcast %47 : vector<64x1xf32> to vector<64x64xf32>
    %49 = arith.mulf %44, %48 : vector<64x64xf32>
    %50 = arith.truncf %49 : vector<64x64xf32> to vector<64x64xbf16>
    %cst_17 = arith.constant dense<0.000000e+00> : vector<64x32xf32>
    %51 = tpu.matmul %50, %38, %cst_17 {dimension_numbers = #tpu.dot_dimension_numbers<[1], [0], [0], [1], [0, 0, 1, 1], [], []>} : vector<64x64xbf16>, vector<64x32xbf16>, vector<64x32xf32> -> vector<64x32xf32>
    %52 = arith.truncf %51 : vector<64x32xf32> to vector<64x32xbf16>
    %c32 = arith.constant 32 : index
    %c0_18 = arith.constant 0 : index
    %53 = vector.load %arg3[%c32, %c0_18] : memref<128x128xbf16, #tpu.memory_space<vmem>>, vector<32x128xbf16>
    %cst_19 = arith.constant dense<0.000000e+00> : vector<64x128xf32>
    %54 = tpu.matmul %52, %53, %cst_19 {dimension_numbers = #tpu.dot_dimension_numbers<[1], [0], [0], [1], [0, 0, 1, 1], [], []>} : vector<64x32xbf16>, vector<32x128xbf16>, vector<64x128xf32> -> vector<64x128xf32>
    %55 = arith.addf %30, %54 : vector<64x128xf32>
    %56 = vector.extract_strided_slice %4 {offsets = [0, 64], sizes = [64, 32], strides = [1, 1]} : vector<64x384xf32> to vector<64x32xf32>
    %cst_20 = arith.constant 0.176776692 : f32
    %57 = vector.broadcast %cst_20 : f32 to vector<64x32xf32>
    %58 = arith.mulf %56, %57 : vector<64x32xf32>
    %59 = arith.truncf %58 : vector<64x32xf32> to vector<64x32xbf16>
    %60 = vector.extract_strided_slice %4 {offsets = [0, 192], sizes = [64, 32], strides = [1, 1]} : vector<64x384xf32> to vector<64x32xf32>
    %61 = arith.truncf %60 : vector<64x32xf32> to vector<64x32xbf16>
    %62 = vector.extract_strided_slice %4 {offsets = [0, 320], sizes = [64, 32], strides = [1, 1]} : vector<64x384xf32> to vector<64x32xf32>
    %63 = arith.truncf %62 : vector<64x32xf32> to vector<64x32xbf16>
    %cst_21 = arith.constant dense<0.000000e+00> : vector<64x64xf32>
    %64 = tpu.matmul %59, %61, %cst_21 {dimension_numbers = #tpu.dot_dimension_numbers<[1], [1], [0], [0], [0, 0, 1, 0], [], []>} : vector<64x32xbf16>, vector<64x32xbf16>, vector<64x64xf32> -> vector<64x64xf32>
    %cst_22 = arith.constant dense<0xFF800000> : vector<64xf32>
    %65 = vector.multi_reduction <maximumf>, %64, %cst_22 [1] : vector<64x64xf32> to vector<64xf32>
    %66 = vector.shape_cast %65 : vector<64xf32> to vector<64x1xf32>
    %67 = vector.broadcast %66 : vector<64x1xf32> to vector<64x64xf32>
    %68 = arith.subf %64, %67 : vector<64x64xf32>
    %69 = math.exp %68 : vector<64x64xf32>
    %cst_23 = arith.constant dense<0.000000e+00> : vector<64xf32>
    %70 = vector.multi_reduction <add>, %69, %cst_23 [1] : vector<64x64xf32> to vector<64xf32>
    %71 = vector.shape_cast %70 : vector<64xf32> to vector<64x1xf32>
    %72 = tpu.reciprocal %71 {approx = true} : vector<64x1xf32> -> vector<64x1xf32>
    %73 = vector.broadcast %72 : vector<64x1xf32> to vector<64x64xf32>
    %74 = arith.mulf %69, %73 : vector<64x64xf32>
    %75 = arith.truncf %74 : vector<64x64xf32> to vector<64x64xbf16>
    %cst_24 = arith.constant dense<0.000000e+00> : vector<64x32xf32>
    %76 = tpu.matmul %75, %63, %cst_24 {dimension_numbers = #tpu.dot_dimension_numbers<[1], [0], [0], [1], [0, 0, 1, 1], [], []>} : vector<64x64xbf16>, vector<64x32xbf16>, vector<64x32xf32> -> vector<64x32xf32>
    %77 = arith.truncf %76 : vector<64x32xf32> to vector<64x32xbf16>
    %c64 = arith.constant 64 : index
    %c0_25 = arith.constant 0 : index
    %78 = vector.load %arg3[%c64, %c0_25] : memref<128x128xbf16, #tpu.memory_space<vmem>>, vector<32x128xbf16>
    %cst_26 = arith.constant dense<0.000000e+00> : vector<64x128xf32>
    %79 = tpu.matmul %77, %78, %cst_26 {dimension_numbers = #tpu.dot_dimension_numbers<[1], [0], [0], [1], [0, 0, 1, 1], [], []>} : vector<64x32xbf16>, vector<32x128xbf16>, vector<64x128xf32> -> vector<64x128xf32>
    %80 = arith.addf %55, %79 : vector<64x128xf32>
    %81 = vector.extract_strided_slice %4 {offsets = [0, 96], sizes = [64, 32], strides = [1, 1]} : vector<64x384xf32> to vector<64x32xf32>
    %cst_27 = arith.constant 0.176776692 : f32
    %82 = vector.broadcast %cst_27 : f32 to vector<64x32xf32>
    %83 = arith.mulf %81, %82 : vector<64x32xf32>
    %84 = arith.truncf %83 : vector<64x32xf32> to vector<64x32xbf16>
    %85 = vector.extract_strided_slice %4 {offsets = [0, 224], sizes = [64, 32], strides = [1, 1]} : vector<64x384xf32> to vector<64x32xf32>
    %86 = arith.truncf %85 : vector<64x32xf32> to vector<64x32xbf16>
    %87 = vector.extract_strided_slice %4 {offsets = [0, 352], sizes = [64, 32], strides = [1, 1]} : vector<64x384xf32> to vector<64x32xf32>
    %88 = arith.truncf %87 : vector<64x32xf32> to vector<64x32xbf16>
    %cst_28 = arith.constant dense<0.000000e+00> : vector<64x64xf32>
    %89 = tpu.matmul %84, %86, %cst_28 {dimension_numbers = #tpu.dot_dimension_numbers<[1], [1], [0], [0], [0, 0, 1, 0], [], []>} : vector<64x32xbf16>, vector<64x32xbf16>, vector<64x64xf32> -> vector<64x64xf32>
    %cst_29 = arith.constant dense<0xFF800000> : vector<64xf32>
    %90 = vector.multi_reduction <maximumf>, %89, %cst_29 [1] : vector<64x64xf32> to vector<64xf32>
    %91 = vector.shape_cast %90 : vector<64xf32> to vector<64x1xf32>
    %92 = vector.broadcast %91 : vector<64x1xf32> to vector<64x64xf32>
    %93 = arith.subf %89, %92 : vector<64x64xf32>
    %94 = math.exp %93 : vector<64x64xf32>
    %cst_30 = arith.constant dense<0.000000e+00> : vector<64xf32>
    %95 = vector.multi_reduction <add>, %94, %cst_30 [1] : vector<64x64xf32> to vector<64xf32>
    %96 = vector.shape_cast %95 : vector<64xf32> to vector<64x1xf32>
    %97 = tpu.reciprocal %96 {approx = true} : vector<64x1xf32> -> vector<64x1xf32>
    %98 = vector.broadcast %97 : vector<64x1xf32> to vector<64x64xf32>
    %99 = arith.mulf %94, %98 : vector<64x64xf32>
    %100 = arith.truncf %99 : vector<64x64xf32> to vector<64x64xbf16>
    %cst_31 = arith.constant dense<0.000000e+00> : vector<64x32xf32>
    %101 = tpu.matmul %100, %88, %cst_31 {dimension_numbers = #tpu.dot_dimension_numbers<[1], [0], [0], [1], [0, 0, 1, 1], [], []>} : vector<64x64xbf16>, vector<64x32xbf16>, vector<64x32xf32> -> vector<64x32xf32>
    %102 = arith.truncf %101 : vector<64x32xf32> to vector<64x32xbf16>
    %c96 = arith.constant 96 : index
    %c0_32 = arith.constant 0 : index
    %103 = vector.load %arg3[%c96, %c0_32] : memref<128x128xbf16, #tpu.memory_space<vmem>>, vector<32x128xbf16>
    %cst_33 = arith.constant dense<0.000000e+00> : vector<64x128xf32>
    %104 = tpu.matmul %102, %103, %cst_33 {dimension_numbers = #tpu.dot_dimension_numbers<[1], [0], [0], [1], [0, 0, 1, 1], [], []>} : vector<64x32xbf16>, vector<32x128xbf16>, vector<64x128xf32> -> vector<64x128xf32>
    %105 = arith.addf %80, %104 : vector<64x128xf32>
    %c0_34 = arith.constant 0 : index
    %c0_35 = arith.constant 0 : index
    %106 = vector.load %arg4[%c0_34, %c0_35] : memref<1x128xf32, #tpu.memory_space<vmem>>, vector<1x128xf32>
    %107 = vector.broadcast %106 : vector<1x128xf32> to vector<64x128xf32>
    %108 = arith.addf %105, %107 : vector<64x128xf32>
    %c0_36 = arith.constant 0 : index
    %c0_37 = arith.constant 0 : index
    %c0_38 = arith.constant 0 : index
    %109 = vector.load %arg5[%c0_36, %c0_37, %c0_38] : memref<1x64x128xf32, #tpu.memory_space<vmem>>, vector<1x64x128xf32>
    %110 = vector.shape_cast %109 : vector<1x64x128xf32> to vector<64x128xf32>
    %111 = vector.shape_cast %108 : vector<64x128xf32> to vector<1x64x128xf32>
    tpu.vector_store %arg5[%c0_36, %c0_37, %c0_38], %111 {strides = array<i32>} : memref<1x64x128xf32, #tpu.memory_space<vmem>>, vector<1x64x128xf32>,
    return
  }
  func.func @transform_0(%arg0: i32) -> (i32, i32, i32) {
    %c0_i32 = arith.constant 0 : i32
    %c0_i32_0 = arith.constant 0 : i32
    %c0_i32_1 = arith.constant 0 : i32
    return %arg0, %c0_i32, %c0_i32_0 : i32, i32, i32
  }
  func.func @transform_1(%arg0: i32) -> (i32, i32) {
    %c0_i32 = arith.constant 0 : i32
    %c0_i32_0 = arith.constant 0 : i32
    %c0_i32_1 = arith.constant 0 : i32
    return %c0_i32, %c0_i32_0 : i32, i32
  }
  func.func @transform_2(%arg0: i32) -> (i32, i32) {
    %c0_i32 = arith.constant 0 : i32
    %c0_i32_0 = arith.constant 0 : i32
    %c0_i32_1 = arith.constant 0 : i32
    return %c0_i32, %c0_i32_0 : i32, i32
  }
  func.func @transform_3(%arg0: i32) -> (i32, i32) {
    %c0_i32 = arith.constant 0 : i32
    %c0_i32_0 = arith.constant 0 : i32
    %c0_i32_1 = arith.constant 0 : i32
    return %c0_i32, %c0_i32_0 : i32, i32
  }
  func.func @transform_4(%arg0: i32) -> (i32, i32, i32) {
    %c0_i32 = arith.constant 0 : i32
    %c0_i32_0 = arith.constant 0 : i32
    %c0_i32_1 = arith.constant 0 : i32
    return %arg0, %c0_i32, %c0_i32_0 : i32, i32, i32
  }
}

</mosaic_0001>

<llo_original>
// kernel: tpu_custom_call.1
$region0: #{tpu_custom_call.1}
  #allocation0 [shape = 'u32[]', space=smem, size = 0x4, offset = 0x4, fixed_abs, tag = 'smem constant byte address 0x4 - core index']
  #allocation1 [shape = 'u32[72,128]{1,0:T(1,128)}', space=vmem, size = 0x9000, scoped, tag = 'internal scratch']
  %s0 = inlined_call_operand.hbm [shape: f32[2,64,128], index: 0, kind: input, shape index: {}]
  %s1 = inlined_call_operand.hbm [shape: bf16[128,384], index: 1, kind: input, shape index: {}]
  %s2 = inlined_call_operand.hbm [shape: bf16[128,128], index: 2, kind: input, shape index: {}]
  %s3 = inlined_call_operand.vmem [shape: f32[1,128], index: 3, kind: input, shape index: {}]
  %s4 = inlined_call_operand.hbm [shape: f32[2,64,128], index: 4, kind: output, shape index: {}]
  %s5 = sld [smem:[#allocation0]]
  $region61: #{tpu_custom_call.1} parent=0
    _
  %s7 = ssub.s32 1, %s5
  %s8 = scalar_select 0, %s7, %s5
  $region1: #{tpu_custom_call.1} parent=0
    #allocation2 [shape = 'u8[65536]{0}', space=vmem, size = 0x10000, scoped, tag = 'input window, operand 0']
    #allocation3 [shape = 's32[2]{0}', space=sflag, size = 0x8, scoped, tag = 'scoped memory for tpu_custom_call.1']
    #allocation4 [shape = 's32[2]{0}', space=sflag, size = 0x8, scoped, tag = 'scoped memory for tpu_custom_call.1']
    #allocation5 [shape = 'u8[98304]{0}', space=vmem, size = 0x18000, scoped, tag = 'input window, operand 1, single buffered']
    #allocation6 [shape = 's32[1]{0}', space=sflag, size = 0x4, scoped, tag = 'scoped memory for tpu_custom_call.1']
    #allocation7 [shape = 'u8[32768]{0}', space=vmem, size = 0x8000, scoped, tag = 'input window, operand 2, single buffered']
    #allocation8 [shape = 'u8[65536]{0}', space=vmem, size = 0x10000, scoped, tag = 'output window, operand 0']
    %9 = vsyncpa [#allocation3], 0
    %s10 = scalar_lea.sflag [#allocation3], 1
    %11 = vsyncpa %s10, 0
    %12 = vsyncpa [#allocation6], 0
    %13 = vsyncpa [#allocation4], 0
    %s14 = scalar_lea.sflag [#allocation4], 1
    %15 = vsyncpa %s14, 0
    loop: start=0, step=1, limit=4
    $region2: #{tpu_custom_call.1} parent=1 // loop_pre_header
      _
    $region3: #{tpu_custom_call.1} parent=1 // loop_header
      %s17 = sphi 0, %s21
      %p18 = scmp.ge.s32.totalorder %s17, 4
      %s27 = sphi 0, %s29
      %s30 = sphi 0, %s27
      %s31 = sphi 0, %s30
      %s47 = sphi 0, %s31
      %s51 = sphi 0, %s51
      %s53 = sphi 0, %s51
      %s54 = sphi 0, %s53
      %s68 = sphi 0, %s54
      %s72 = sphi 0, %s72
      %s74 = sphi 0, %s72
      %s75 = sphi 0, %s74
      %s89 = sphi 0, %s75
      %s93 = sphi 0, %s93
      %s95 = sphi 0, %s93
      %s96 = sphi 0, %s95
      %s110 = sphi 0, %s96
      %s116 = sphi 0, %s118
      %s119 = sphi 0, %s116
      %s120 = sphi 0, %s119
      %s136 = sphi 0, %s120
    $region4: #{tpu_custom_call.1} parent=1 // loop_header_branch
      %20 = sbr.rel (%p18) target = $region8
    $region5: #{tpu_custom_call.1} parent=1 // loop_body
      %s22 = ssub.s32 %s17, 1
      %s23 = ssub.s32 %s17, 2
      %s24 = sadd.s32 %s17, 1
      %s25 = ssub.s32 %s17, %s24
      %p26 = scmp.eq.s32.totalorder %s25, 0
      %s28 = sadd.s32 %s27, 1
      %s29 = scalar_select %p26, %s27, %s28
      %p32 = pneg %p26
      %p33 = scmp.eq.s32.totalorder %s17, 1
      %p34 = por %p32, %p33
      %p35 = scmp.ne.s32.totalorder %s27, %s30
      %p36 = scmp.eq.s32.totalorder %s17, 0
      %p37 = por %p35, %p36
      %p38 = scmp.ne.s32.totalorder %s27, %s30
      %p39 = scmp.eq.s32.totalorder %s22, 1
      %p40 = por %p38, %p39
      %p41 = scmp.ne.s32.totalorder %s30, %s31
      %p42 = scmp.eq.s32.totalorder %s22, 0
      %p43 = por %p41, %p42
      %p44 = scmp.ne.s32.totalorder %s30, %s31
      %p45 = scmp.eq.s32.totalorder %s23, 1
      %p46 = por %p44, %p45
      %p48 = scmp.ne.s32.totalorder %s31, %s47
      %p49 = scmp.eq.s32.totalorder %s23, 0
      %p50 = por %p48, %p49
      %s52 = sadd.s32 %s51, 1
      %p55 = scmp.eq.s32.totalorder %s17, 1
      %p56 = scmp.ne.s32.totalorder %s51, %s53
      %p57 = scmp.eq.s32.totalorder %s17, 0
      %p58 = por %p56, %p57
      %p59 = scmp.ne.s32.totalorder %s51, %s53
      %p60 = scmp.eq.s32.totalorder %s22, 1
      %p61 = por %p59, %p60
      %p62 = scmp.ne.s32.totalorder %s53, %s54
      %p63 = scmp.eq.s32.totalorder %s22, 0
      %p64 = por %p62, %p63
      %p65 = scmp.ne.s32.totalorder %s53, %s54
      %p66 = scmp.eq.s32.totalorder %s23, 1
      %p67 = por %p65, %p66
      %p69 = scmp.ne.s32.totalorder %s54, %s68
      %p70 = scmp.eq.s32.totalorder %s23, 0
      %p71 = por %p69, %p70
      %s73 = sadd.s32 %s72, 1
      %p76 = scmp.eq.s32.totalorder %s17, 1
      %p77 = scmp.ne.s32.totalorder %s72, %s74
      %p78 = scmp.eq.s32.totalorder %s17, 0
      %p79 = por %p77, %p78
      %p80 = scmp.ne.s32.totalorder %s72, %s74
      %p81 = scmp.eq.s32.totalorder %s22, 1
      %p82 = por %p80, %p81
      %p83 = scmp.ne.s32.totalorder %s74, %s75
      %p84 = scmp.eq.s32.totalorder %s22, 0
      %p85 = por %p83, %p84
      %p86 = scmp.ne.s32.totalorder %s74, %s75
      %p87 = scmp.eq.s32.totalorder %s23, 1
      %p88 = por %p86, %p87
      %p90 = scmp.ne.s32.totalorder %s75, %s89
      %p91 = scmp.eq.s32.totalorder %s23, 0
      %p92 = por %p90, %p91
      %s94 = sadd.s32 %s93, 1
      %p97 = scmp.eq.s32.totalorder %s17, 1
      %p98 = scmp.ne.s32.totalorder %s93, %s95
      %p99 = scmp.eq.s32.totalorder %s17, 0
      %p100 = por %p98, %p99
      %p101 = scmp.ne.s32.totalorder %s93, %s95
      %p102 = scmp.eq.s32.totalorder %s22, 1
      %p103 = por %p101, %p102
      %p104 = scmp.ne.s32.totalorder %s95, %s96
      %p105 = scmp.eq.s32.totalorder %s22, 0
      %p106 = por %p104, %p105
      %p107 = scmp.ne.s32.totalorder %s95, %s96
      %p108 = scmp.eq.s32.totalorder %s23, 1
      %p109 = por %p107, %p108
      %p111 = scmp.ne.s32.totalorder %s96, %s110
      %p112 = scmp.eq.s32.totalorder %s23, 0
      %p113 = por %p111, %p112
      %s114 = ssub.s32 %s17, %s24
      %p115 = scmp.eq.s32.totalorder %s114, 0
      %s117 = sadd.s32 %s116, 1
      %s118 = scalar_select %p115, %s116, %s117
      %p121 = pneg %p115
      %p122 = scmp.eq.s32.totalorder %s17, 1
      %p123 = por %p121, %p122
      %p124 = scmp.ne.s32.totalorder %s116, %s119
      %p125 = scmp.eq.s32.totalorder %s17, 0
      %p126 = por %p124, %p125
      %p127 = scmp.ne.s32.totalorder %s116, %s119
      %p128 = scmp.eq.s32.totalorder %s22, 1
      %p129 = por %p127, %p128
      %p130 = scmp.ne.s32.totalorder %s119, %s120
      %p131 = scmp.eq.s32.totalorder %s22, 0
      %p132 = por %p130, %p131
      %p133 = scmp.ne.s32.totalorder %s119, %s120
      %p134 = scmp.eq.s32.totalorder %s23, 1
      %p135 = por %p133, %p134
      %p137 = scmp.ne.s32.totalorder %s120, %s136
      %p138 = scmp.eq.s32.totalorder %s23, 0
      %p139 = por %p137, %p138
      %p140 = scmp.le.s32.totalorder 1, %s17
      %p141 = scmp.lt.s32.totalorder %s17, 3
      %p142 = pnand %p140, %p141
      %p143 = pneg %p142
      // Predicated region
      $region9: #{tpu_custom_call.1} parent=5 // pred_check
        _
      $region10: #{tpu_custom_call.1} parent=5 // pred_check_branch
        %145 = sbr.rel (%p142) target = $region12
      $region11: #{tpu_custom_call.1} parent=5 // pred_region
        %s146 = ssub.s32 %s17, 1
        // Predicated region
        $region13: #{tpu_custom_call.1} parent=11 // pred_check
          %p147 = pneg %p64
        $region14: #{tpu_custom_call.1} parent=11 // pred_check_branch
          %149 = sbr.rel (%p147) target = $region16
        $region15: #{tpu_custom_call.1} parent=11 // pred_region
          %151 = vsyncadd [#allocation6], 0
          %s152 = sshll.u32 %s1, 4
          %s153 = int_to_ptr.hbm [resolvable:$true] %s152
          %s154 = sshll.u32 [#allocation5], 4
          %s155 = int_to_ptr.vmem [resolvable:$true] %s154
          %160 = dma.hbm_to_vmem [thread:$0]  %s153, 3072, %s155, [#allocation6], 192, 192, 12
        $region16: #{tpu_custom_call.1} parent=11 // pred_fallthru
          _
        // Predicated region
        $region17: #{tpu_custom_call.1} parent=11 // pred_check
          %p161 = pneg %p85
        $region18: #{tpu_custom_call.1} parent=11 // pred_check_branch
          %163 = sbr.rel (%p161) target = $region20
        $region19: #{tpu_custom_call.1} parent=11 // pred_region
          %165 = vsyncadd [#allocation6], 0
          %s166 = sshll.u32 %s2, 4
          %s167 = int_to_ptr.hbm [resolvable:$true] %s166
          %s168 = sshll.u32 [#allocation7], 4
          %s169 = int_to_ptr.vmem [resolvable:$true] %s168
          %174 = dma.hbm_to_vmem [thread:$0]  %s167, 1024, %s169, [#allocation6], 64, 64, 4
        $region20: #{tpu_custom_call.1} parent=11 // pred_fallthru
          _
        // Predicated region
        $region21: #{tpu_custom_call.1} parent=11 // pred_check
          %p175 = pneg %p106
        $region22: #{tpu_custom_call.1} parent=11 // pred_check_branch
          %177 = sbr.rel (%p175) target = $region24
        $region23: #{tpu_custom_call.1} parent=11 // pred_region
          _
        $region24: #{tpu_custom_call.1} parent=11 // pred_fallthru
          _
      $region12: #{tpu_custom_call.1} parent=5 // pred_fallthru
        _
      %p178 = scmp.lt.s32.totalorder %s17, 2
      // Predicated region
      $region25: #{tpu_custom_call.1} parent=5 // pred_check
        %p179 = pneg %p178
      $region26: #{tpu_custom_call.1} parent=5 // pred_check_branch
        %181 = sbr.rel (%p179) target = $region28
      $region27: #{tpu_custom_call.1} parent=5 // pred_region
        // Predicated region
        $region29: #{tpu_custom_call.1} parent=27 // pred_check
          %p182 = pneg %p37
        $region30: #{tpu_custom_call.1} parent=27 // pred_check_branch
          %184 = sbr.rel (%p182) target = $region32
        $region31: #{tpu_custom_call.1} parent=27 // pred_region
          %s185 = sand.u32 %s27, 1
          %s186 = scalar_lea.sflag [#allocation3], %s185
          %s187 = sand.u32 %s27, 1
          %s188 = smul.addr %s187, 64
          %s189 = scalar_lea.vmem [#allocation2], %s188
          %191 = vsyncadd %s186, 0
          %s192 = smul.addr %s17, 8
          %s193 = smul.addr %s192, 8
          %s194 = scalar_lea.hbm %s0, %s193
          %s195 = sshll.u32 %s194, 4
          %s196 = int_to_ptr.hbm [resolvable:$true] %s195
          %s197 = sshll.u32 %s189, 4
          %s198 = int_to_ptr.vmem [resolvable:$true] %s197
          %203 = dma.hbm_to_vmem [thread:$0]  %s196, 1024, %s198, %s186, 128, 128, 8
        $region32: #{tpu_custom_call.1} parent=27 // pred_fallthru
          _
      $region28: #{tpu_custom_call.1} parent=5 // pred_fallthru
        _
      %p204 = scmp.le.s32.totalorder 1, %s17
      %p205 = scmp.lt.s32.totalorder %s17, 3
      %p206 = pnand %p204, %p205
      %p207 = pneg %p206
      // Predicated region
      $region33: #{tpu_custom_call.1} parent=5 // pred_check
        _
      $region34: #{tpu_custom_call.1} parent=5 // pred_check_branch
        %209 = sbr.rel (%p206) target = $region36
      $region35: #{tpu_custom_call.1} parent=5 // pred_region
        %s210 = ssub.s32 %s17, 1
        %s211 = sand.u32 %s30, 1
        %s212 = scalar_lea.sflag [#allocation3], %s211
        %s213 = sand.u32 %s30, 1
        %s214 = smul.addr %s213, 64
        %s215 = scalar_lea.vmem [#allocation2], %s214
        // Predicated region
        $region37: #{tpu_custom_call.1} parent=35 // pred_check
          %p216 = pneg %p43
        $region38: #{tpu_custom_call.1} parent=35 // pred_check_branch
          %218 = sbr.rel (%p216) target = $region40
        $region39: #{tpu_custom_call.1} parent=35 // pred_region
          %220 = dma.done %s212, 1024
        $region40: #{tpu_custom_call.1} parent=35 // pred_fallthru
          _
        // Predicated region
        $region41: #{tpu_custom_call.1} parent=35 // pred_check
          %p221 = pneg %p64
        $region42: #{tpu_custom_call.1} parent=35 // pred_check_branch
          %223 = sbr.rel (%p221) target = $region44
        $region43: #{tpu_custom_call.1} parent=35 // pred_region
          %225 = dma.done [#allocation6], 3072
        $region44: #{tpu_custom_call.1} parent=35 // pred_fallthru
          _
        // Predicated region
        $region45: #{tpu_custom_call.1} parent=35 // pred_check
          %p226 = pneg %p85
        $region46: #{tpu_custom_call.1} parent=35 // pred_check_branch
          %228 = sbr.rel (%p226) target = $region48
        $region47: #{tpu_custom_call.1} parent=35 // pred_region
          %230 = dma.done [#allocation6], 1024
        $region48: #{tpu_custom_call.1} parent=35 // pred_fallthru
          _
        %s231 = sand.u32 %s30, 1
        %s232 = scalar_lea.sflag [#allocation3], %s231
        %s233 = sand.u32 %s30, 1
        %s234 = smul.addr %s233, 64
        %s235 = scalar_lea.vmem [#allocation2], %s234
        %p236 = pneg %p43
        %p237 = pneg %p40
        %p238 = pneg %p64
        %p239 = pneg %p61
        %p240 = pneg %p85
        %p241 = pneg %p82
        %p242 = pneg %p106
        %p243 = pneg %p103
        %p244 = pneg %p132
        %p245 = pneg %p129
        %s246 = sand.u32 %s119, 1
        %s247 = scalar_lea.sflag [#allocation4], %s246
        %s248 = sand.u32 %s119, 1
        %s249 = smul.addr %s248, 64
        %s250 = scalar_lea.vmem [#allocation8], %s249
        %v252 = vld [vmem:[%s215] sm:$0xff]
        %v253 = vld [vmem:[%s215 + $0x8] sm:$0xff]
        %v254 = vld [vmem:[%s215 + $0x10] sm:$0xff]
        %v255 = vld [vmem:[%s215 + $0x18] sm:$0xff]
        %v256 = vld [vmem:[%s215 + $0x20] sm:$0xff]
        %v257 = vld [vmem:[%s215 + $0x28] sm:$0xff]
        %v258 = vld [vmem:[%s215 + $0x30] sm:$0xff]
        %v259 = vld [vmem:[%s215 + $0x38] sm:$0xff]
        %v260 = vpack.c.bf16 %v253, %v252
        %v261 = vpack.c.bf16 %v255, %v254
        %v262 = vpack.c.bf16 %v257, %v256
        %v263 = vpack.c.bf16 %v259, %v258
        %v264 = vld [vmem:[#allocation5] sm:$0xff]
        %v265 = vld [vmem:[#allocation5 + $0x8] sm:$0xf]
        %v266 = vld [vmem:[#allocation5 + $0xc] sm:$0xff]
        %v267 = vld [vmem:[#allocation5 + $0x14] sm:$0xf]
        %v268 = vld [vmem:[#allocation5 + $0x18] sm:$0xff]
        %v269 = vld [vmem:[#allocation5 + $0x20] sm:$0xf]
        %v270 = vld [vmem:[#allocation5 + $0x24] sm:$0xff]
        %v271 = vld [vmem:[#allocation5 + $0x2c] sm:$0xf]
        %v272 = vld [vmem:[#allocation5 + $0x30] sm:$0xff]
        %v273 = vld [vmem:[#allocation5 + $0x38] sm:$0xf]
        %v274 = vld [vmem:[#allocation5 + $0x3c] sm:$0xff]
        %v275 = vld [vmem:[#allocation5 + $0x44] sm:$0xf]
        %v276 = vld [vmem:[#allocation5 + $0x48] sm:$0xff]
        %v277 = vld [vmem:[#allocation5 + $0x50] sm:$0xf]
        %v278 = vld [vmem:[#allocation5 + $0x54] sm:$0xff]
        %v279 = vld [vmem:[#allocation5 + $0x5c] sm:$0xf]
        %v280 = vld [vmem:[#allocation5 + $0x60] sm:$0xff]
        %v281 = vld [vmem:[#allocation5 + $0x68] sm:$0xf]
        %v282 = vld [vmem:[#allocation5 + $0x6c] sm:$0xff]
        %v283 = vld [vmem:[#allocation5 + $0x74] sm:$0xf]
        %v284 = vld [vmem:[#allocation5 + $0x78] sm:$0xff]
        %v285 = vld [vmem:[#allocation5 + $0x80] sm:$0xf]
        %v286 = vld [vmem:[#allocation5 + $0x84] sm:$0xff]
        %v287 = vld [vmem:[#allocation5 + $0x8c] sm:$0xf]
        %v288 = vld [vmem:[#allocation5 + $0x90] sm:$0xff]
        %v289 = vld [vmem:[#allocation5 + $0x98] sm:$0xf]
        %v290 = vld [vmem:[#allocation5 + $0x9c] sm:$0xff]
        %v291 = vld [vmem:[#allocation5 + $0xa4] sm:$0xf]
        %v292 = vld [vmem:[#allocation5 + $0xa8] sm:$0xff]
        %v293 = vld [vmem:[#allocation5 + $0xb0] sm:$0xf]
        %v294 = vld [vmem:[#allocation5 + $0xb4] sm:$0xff]
        %v295 = vld [vmem:[#allocation5 + $0xbc] sm:$0xf]
        %v328 = vunpack.c.l.b16 %v264
        %v329 = vunpack.c.h.b16 %v264
        %v330 = vunpack.c.l.b16 %v265
        %v331 = vunpack.c.l.b16 %v266
        %v332 = vunpack.c.h.b16 %v266
        %v333 = vunpack.c.l.b16 %v267
        %v334 = vunpack.c.l.b16 %v268
        %v335 = vunpack.c.h.b16 %v268
        %v336 = vunpack.c.l.b16 %v269
        %v337 = vunpack.c.l.b16 %v270
        %v338 = vunpack.c.h.b16 %v270
        %v339 = vunpack.c.l.b16 %v271
        %v340 = vunpack.c.l.b16 %v272
        %v341 = vunpack.c.h.b16 %v272
        %v342 = vunpack.c.l.b16 %v273
        %v343 = vunpack.c.l.b16 %v274
        %v344 = vunpack.c.h.b16 %v274
        %v345 = vunpack.c.l.b16 %v275
        %v346 = vunpack.c.l.b16 %v276
        %v347 = vunpack.c.h.b16 %v276
        %v348 = vunpack.c.l.b16 %v277
        %v349 = vunpack.c.l.b16 %v278
        %v350 = vunpack.c.h.b16 %v278
        %v351 = vunpack.c.l.b16 %v279
        %v352 = vunpack.c.l.b16 %v280
        %v353 = vunpack.c.h.b16 %v280
        %v354 = vunpack.c.l.b16 %v281
        %v355 = vunpack.c.l.b16 %v282
        %v356 = vunpack.c.h.b16 %v282
        %v357 = vunpack.c.l.b16 %v283
        %v358 = vunpack.c.l.b16 %v284
        %v359 = vunpack.c.h.b16 %v284
        %v360 = vunpack.c.l.b16 %v285
        %v361 = vunpack.c.l.b16 %v286
        %v362 = vunpack.c.h.b16 %v286
        %v363 = vunpack.c.l.b16 %v287
        %v364 = vunpack.c.l.b16 %v288
        %v365 = vunpack.c.h.b16 %v288
        %v366 = vunpack.c.l.b16 %v289
        %v367 = vunpack.c.l.b16 %v290
        %v368 = vunpack.c.h.b16 %v290
        %v369 = vunpack.c.l.b16 %v291
        %v370 = vunpack.c.l.b16 %v292
        %v371 = vunpack.c.h.b16 %v292
        %v372 = vunpack.c.l.b16 %v293
        %v373 = vunpack.c.l.b16 %v294
        %v374 = vunpack.c.h.b16 %v294
        %v375 = vunpack.c.l.b16 %v295
        %v376 = vpack.c.b16 %v331, %v328
        %v377 = vpack.c.b16 %v332, %v329
        %v378 = vpack.c.b16 %v333, %v330
        %v379 = vpack.c.b16 %v337, %v334
        %v380 = vpack.c.b16 %v338, %v335
        %v381 = vpack.c.b16 %v339, %v336
        %v382 = vpack.c.b16 %v343, %v340
        %v383 = vpack.c.b16 %v344, %v341
        %v384 = vpack.c.b16 %v345, %v342
        %v385 = vpack.c.b16 %v349, %v346
        %v386 = vpack.c.b16 %v350, %v347
        %v387 = vpack.c.b16 %v351, %v348
        %v388 = vpack.c.b16 %v355, %v352
        %v389 = vpack.c.b16 %v356, %v353
        %v390 = vpack.c.b16 %v357, %v354
        %v391 = vpack.c.b16 %v361, %v358
        %v392 = vpack.c.b16 %v362, %v359
        %v393 = vpack.c.b16 %v363, %v360
        %v394 = vpack.c.b16 %v367, %v364
        %v395 = vpack.c.b16 %v368, %v365
        %v396 = vpack.c.b16 %v369, %v366
        %v397 = vpack.c.b16 %v373, %v370
        %v398 = vpack.c.b16 %v374, %v371
        %v399 = vpack.c.b16 %v375, %v372
        %424 = vmatpush.bf16.msra.mxu0 %v397
        %425 = vmatpush.bf16.msra.mxu0 %v394
        %426 = vmatpush.bf16.msra.mxu0 %v391
        %427 = vmatpush.bf16.msra.mxu0 %v388
        %428 = vmatpush.bf16.msra.mxu0 %v385
        %429 = vmatpush.bf16.msra.mxu0 %v382
        %430 = vmatpush.bf16.msra.mxu0 %v379
        %431 = vmatpush.bf16.msra.mxu0 %v376
        %432 = vmatmul.bf16.gmra.mxu0 %v260
        %v433 = vpop.f32.mrf.mxu0
        %v434 = vadd.f32 0.0, %v433
        %v435 = vpop.f32.mrf.mxu0
        %v436 = vadd.f32 0.0, %v435
        %437 = vmatmul.bf16.gmra.mxu0 %v261
        %v438 = vpop.f32.mrf.mxu0
        %v439 = vadd.f32 0.0, %v438
        %v440 = vpop.f32.mrf.mxu0
        %v441 = vadd.f32 0.0, %v440
        %442 = vmatmul.bf16.gmra.mxu0 %v262
        %v443 = vpop.f32.mrf.mxu0
        %v444 = vadd.f32 0.0, %v443
        %v445 = vpop.f32.mrf.mxu0
        %v446 = vadd.f32 0.0, %v445
        %447 = vmatmul.bf16.gmra.mxu0 %v263
        %v448 = vpop.f32.mrf.mxu0
        %v449 = vadd.f32 0.0, %v448
        %v450 = vpop.f32.mrf.mxu0
        %v451 = vadd.f32 0.0, %v450
        %452 = vdwg.mxu0
        %453 = vmatpush.bf16.msra.mxu0 %v398
        %454 = vmatpush.bf16.msra.mxu0 %v395
        %455 = vmatpush.bf16.msra.mxu0 %v392
        %456 = vmatpush.bf16.msra.mxu0 %v389
        %457 = vmatpush.bf16.msra.mxu0 %v386
        %458 = vmatpush.bf16.msra.mxu0 %v383
        %459 = vmatpush.bf16.msra.mxu0 %v380
        %460 = vmatpush.bf16.msra.mxu0 %v377
        %461 = vmatmul.bf16.gmra.mxu0 %v260
        %v462 = vpop.f32.mrf.mxu0
        %v463 = vadd.f32 0.0, %v462
        %v464 = vpop.f32.mrf.mxu0
        %v465 = vadd.f32 0.0, %v464
        %466 = vmatmul.bf16.gmra.mxu0 %v261
        %v467 = vpop.f32.mrf.mxu0
        %v468 = vadd.f32 0.0, %v467
        %v469 = vpop.f32.mrf.mxu0
        %v470 = vadd.f32 0.0, %v469
        %471 = vmatmul.bf16.gmra.mxu0 %v262
        %v472 = vpop.f32.mrf.mxu0
        %v473 = vadd.f32 0.0, %v472
        %v474 = vpop.f32.mrf.mxu0
        %v475 = vadd.f32 0.0, %v474
        %476 = vmatmul.bf16.gmra.mxu0 %v263
        %v477 = vpop.f32.mrf.mxu0
        %v478 = vadd.f32 0.0, %v477
        %v479 = vpop.f32.mrf.mxu0
        %v480 = vadd.f32 0.0, %v479
        %481 = vdwg.mxu0
        %482 = vmatpush.bf16.msra.mxu0 %v399
        %483 = vmatpush.bf16.msra.mxu0 %v396
        %484 = vmatpush.bf16.msra.mxu0 %v393
        %485 = vmatpush.bf16.msra.mxu0 %v390
        %486 = vmatpush.bf16.msra.mxu0 %v387
        %487 = vmatpush.bf16.msra.mxu0 %v384
        %488 = vmatpush.bf16.msra.mxu0 %v381
        %489 = vmatpush.bf16.msra.mxu0 %v378
        %490 = vmatmul.bf16.gmra.mxu0 %v260
        %v491 = vpop.f32.mrf.mxu0
        %v492 = vadd.f32 0.0, %v491
        %v493 = vpop.f32.mrf.mxu0
        %v494 = vadd.f32 0.0, %v493
        %495 = vmatmul.bf16.gmra.mxu0 %v261
        %v496 = vpop.f32.mrf.mxu0
        %v497 = vadd.f32 0.0, %v496
        %v498 = vpop.f32.mrf.mxu0
        %v499 = vadd.f32 0.0, %v498
        %500 = vmatmul.bf16.gmra.mxu0 %v262
        %v501 = vpop.f32.mrf.mxu0
        %v502 = vadd.f32 0.0, %v501
        %v503 = vpop.f32.mrf.mxu0
        %v504 = vadd.f32 0.0, %v503
        %505 = vmatmul.bf16.gmra.mxu0 %v263
        %v506 = vpop.f32.mrf.mxu0
        %v507 = vadd.f32 0.0, %v506
        %v508 = vpop.f32.mrf.mxu0
        %v509 = vadd.f32 0.0, %v508
        %510 = vdwg.mxu0
        %v511 = vmul.f32 %v434, 0.17677669
        %v512 = vmul.f32 %v436, 0.17677669
        %v513 = vmul.f32 %v439, 0.17677669
        %v514 = vmul.f32 %v441, 0.17677669
        %v515 = vmul.f32 %v444, 0.17677669
        %v516 = vmul.f32 %v446, 0.17677669
        %v517 = vmul.f32 %v449, 0.17677669
        %v518 = vmul.f32 %v451, 0.17677669
        %v519 = vpack.c.bf16 %v512, %v511
        %v520 = vpack.c.bf16 %v514, %v513
        %v521 = vpack.c.bf16 %v516, %v515
        %v522 = vpack.c.bf16 %v518, %v517
        %v523 = vpack.c.bf16 %v465, %v463
        %v524 = vpack.c.bf16 %v470, %v468
        %v525 = vpack.c.bf16 %v475, %v473
        %v526 = vpack.c.bf16 %v480, %v478
        %v527 = vpack.c.bf16 %v494, %v492
        %v528 = vpack.c.bf16 %v499, %v497
        %v529 = vpack.c.bf16 %v504, %v502
        %v530 = vpack.c.bf16 %v509, %v507
        %vm531 = vcmask 261120
        %v533 = vsel %vm531, %v519, 0
        %v536 = vsel %vm531, %v520, 0
        %v539 = vsel %vm531, %v521, 0
        %v542 = vsel %vm531, %v522, 0
        %v545 = vsel %vm531, %v523, 0
        %v548 = vsel %vm531, %v524, 0
        %v551 = vsel %vm531, %v525, 0
        %v554 = vsel %vm531, %v526, 0
        %556 = vmatpush.bf16.xpose.msra.mxu0 0
        %557 = vmatpush.bf16.xpose.msra.mxu0 0
        %558 = vmatpush.bf16.xpose.msra.mxu0 0
        %559 = vmatpush.bf16.xpose.msra.mxu0 0
        %560 = vmatpush.bf16.xpose.msra.mxu0 %v554
        %561 = vmatpush.bf16.xpose.msra.mxu0 %v551
        %562 = vmatpush.bf16.xpose.msra.mxu0 %v548
        %563 = vmatpush.bf16.xpose.msra.mxu0 %v545
        %564 = vmatmul.bf16.gmra.mxu0 %v533
        %v565 = vpop.f32.mrf.mxu0
        %v566 = vadd.f32 0.0, %v565
        %v567 = vpop.f32.mrf.mxu0
        %v568 = vadd.f32 0.0, %v567
        %569 = vmatmul.bf16.gmra.mxu0 %v536
        %v570 = vpop.f32.mrf.mxu0
        %v571 = vadd.f32 0.0, %v570
        %v572 = vpop.f32.mrf.mxu0
        %v573 = vadd.f32 0.0, %v572
        %574 = vmatmul.bf16.gmra.mxu0 %v539
        %v575 = vpop.f32.mrf.mxu0
        %v576 = vadd.f32 0.0, %v575
        %v577 = vpop.f32.mrf.mxu0
        %v578 = vadd.f32 0.0, %v577
        %579 = vmatmul.bf16.gmra.mxu0 %v542
        %v580 = vpop.f32.mrf.mxu0
        %v581 = vadd.f32 0.0, %v580
        %v582 = vpop.f32.mrf.mxu0
        %v583 = vadd.f32 0.0, %v582
        %584 = vdwg.mxu0
        %vm585 = vcmask 523264
        %v586 = vsel %vm585, %v566, -inf
        %587 = vmax.xlane.f32.xlu0 %v586
        %v588 = vpop.xlane.xlu0 %587
        %v589 = vsel %vm585, %v568, -inf
        %590 = vmax.xlane.f32.xlu0 %v589
        %v591 = vpop.xlane.xlu0 %590
        %v592 = vsel %vm585, %v571, -inf
        %593 = vmax.xlane.f32.xlu0 %v592
        %v594 = vpop.xlane.xlu0 %593
        %v595 = vsel %vm585, %v573, -inf
        %596 = vmax.xlane.f32.xlu0 %v595
        %v597 = vpop.xlane.xlu0 %596
        %v598 = vsel %vm585, %v576, -inf
        %599 = vmax.xlane.f32.xlu0 %v598
        %v600 = vpop.xlane.xlu0 %599
        %v601 = vsel %vm585, %v578, -inf
        %602 = vmax.xlane.f32.xlu0 %v601
        %v603 = vpop.xlane.xlu0 %602
        %v604 = vsel %vm585, %v581, -inf
        %605 = vmax.xlane.f32.xlu0 %v604
        %v606 = vpop.xlane.xlu0 %605
        %v607 = vsel %vm585, %v583, -inf
        %608 = vmax.xlane.f32.xlu0 %v607
        %v609 = vpop.xlane.xlu0 %608
        %v610 = vsub.f32 %v566, %v588
        %v611 = vsub.f32 %v568, %v591
        %v612 = vsub.f32 %v571, %v594
        %v613 = vsub.f32 %v573, %v597
        %v614 = vsub.f32 %v576, %v600
        %v615 = vsub.f32 %v578, %v603
        %v616 = vsub.f32 %v581, %v606
        %v617 = vsub.f32 %v583, %v609
        %v618 = vmul.f32 %v610, 1.442695
        %v619 = vpow.pop %v618
        %v620 = vmul.f32 %v611, 1.442695
        %v621 = vpow.pop %v620
        %v622 = vmul.f32 %v612, 1.442695
        %v623 = vpow.pop %v622
        %v624 = vmul.f32 %v613, 1.442695
        %v625 = vpow.pop %v624
        %v626 = vmul.f32 %v614, 1.442695
        %v627 = vpow.pop %v626
        %v628 = vmul.f32 %v615, 1.442695
        %v629 = vpow.pop %v628
        %v630 = vmul.f32 %v616, 1.442695
        %v631 = vpow.pop %v630
        %v632 = vmul.f32 %v617, 1.442695
        %v633 = vpow.pop %v632
        %v634 = vsel %vm585, %v619, 0.0
        %635 = vadd.xlane.f32.xlu0 %v634
        %v636 = vpop.xlane.xlu0 %635
        %v637 = vsel %vm585, %v621, 0.0
        %638 = vadd.xlane.f32.xlu0 %v637
        %v639 = vpop.xlane.xlu0 %638
        %v640 = vsel %vm585, %v623, 0.0
        %641 = vadd.xlane.f32.xlu0 %v640
        %v642 = vpop.xlane.xlu0 %641
        %v643 = vsel %vm585, %v625, 0.0
        %644 = vadd.xlane.f32.xlu0 %v643
        %v645 = vpop.xlane.xlu0 %644
        %v646 = vsel %vm585, %v627, 0.0
        %647 = vadd.xlane.f32.xlu0 %v646
        %v648 = vpop.xlane.xlu0 %647
        %v649 = vsel %vm585, %v629, 0.0
        %650 = vadd.xlane.f32.xlu0 %v649
        %v651 = vpop.xlane.xlu0 %650
        %v652 = vsel %vm585, %v631, 0.0
        %653 = vadd.xlane.f32.xlu0 %v652
        %v654 = vpop.xlane.xlu0 %653
        %v655 = vsel %vm585, %v633, 0.0
        %656 = vadd.xlane.f32.xlu0 %v655
        %v657 = vpop.xlane.xlu0 %656
        %v658 = vrcp.pop %v636
        %v659 = vrcp.pop %v639
        %v660 = vrcp.pop %v642
        %v661 = vrcp.pop %v645
        %v662 = vrcp.pop %v648
        %v663 = vrcp.pop %v651
        %v664 = vrcp.pop %v654
        %v665 = vrcp.pop %v657
        %v666 = vmul.f32 %v619, %v658
        %v667 = vmul.f32 %v621, %v659
        %v668 = vmul.f32 %v623, %v660
        %v669 = vmul.f32 %v625, %v661
        %v670 = vmul.f32 %v627, %v662
        %v671 = vmul.f32 %v629, %v663
        %v672 = vmul.f32 %v631, %v664
        %v673 = vmul.f32 %v633, %v665
        %v674 = vpack.c.bf16 %v667, %v666
        %v675 = vpack.c.bf16 %v669, %v668
        %v676 = vpack.c.bf16 %v671, %v670
        %v677 = vpack.c.bf16 %v673, %v672
        %v679 = vsel %vm585, %v674, 0
        %v682 = vsel %vm585, %v675, 0
        %v685 = vsel %vm585, %v676, 0
        %v688 = vsel %vm585, %v677, 0
        %690 = vmatpush.bf16.msra.mxu0 0
        %691 = vmatpush.bf16.msra.mxu0 0
        %692 = vmatpush.bf16.msra.mxu0 0
        %693 = vmatpush.bf16.msra.mxu0 0
        %694 = vmatpush.bf16.msra.mxu0 %v530
        %695 = vmatpush.bf16.msra.mxu0 %v529
        %696 = vmatpush.bf16.msra.mxu0 %v528
        %697 = vmatpush.bf16.msra.mxu0 %v527
        %698 = vmatmul.bf16.gmra.mxu0 %v679
        %v699 = vpop.f32.mrf.mxu0
        %v700 = vadd.f32 0.0, %v699
        %v701 = vpop.f32.mrf.mxu0
        %v702 = vadd.f32 0.0, %v701
        %703 = vmatmul.bf16.gmra.mxu0 %v682
        %v704 = vpop.f32.mrf.mxu0
        %v705 = vadd.f32 0.0, %v704
        %v706 = vpop.f32.mrf.mxu0
        %v707 = vadd.f32 0.0, %v706
        %708 = vmatmul.bf16.gmra.mxu0 %v685
        %v709 = vpop.f32.mrf.mxu0
        %v710 = vadd.f32 0.0, %v709
        %v711 = vpop.f32.mrf.mxu0
        %v712 = vadd.f32 0.0, %v711
        %713 = vmatmul.bf16.gmra.mxu0 %v688
        %v714 = vpop.f32.mrf.mxu0
        %v715 = vadd.f32 0.0, %v714
        %v716 = vpop.f32.mrf.mxu0
        %v717 = vadd.f32 0.0, %v716
        %718 = vdwg.mxu0
        %v719 = vpack.c.bf16 %v702, %v700
        %v720 = vpack.c.bf16 %v707, %v705
        %v721 = vpack.c.bf16 %v712, %v710
        %v722 = vpack.c.bf16 %v717, %v715
        %v723 = vld [vmem:[#allocation7] sm:$0xf]
        %v724 = vld [vmem:[#allocation7 + $0x4] sm:$0xf]
        %v725 = vld [vmem:[#allocation7 + $0x8] sm:$0xf]
        %v726 = vld [vmem:[#allocation7 + $0xc] sm:$0xf]
        %731 = vrot.lane.b32.xlu0 %v519, 96
        %v732 = vpop.permute.xlu0 %731
        %733 = vrot.lane.b32.xlu0 %v520, 96
        %v734 = vpop.permute.xlu0 %733
        %735 = vrot.lane.b32.xlu0 %v521, 96
        %v736 = vpop.permute.xlu0 %735
        %737 = vrot.lane.b32.xlu0 %v522, 96
        %v738 = vpop.permute.xlu0 %737
        %743 = vrot.lane.b32.xlu0 %v523, 96
        %v744 = vpop.permute.xlu0 %743
        %745 = vrot.lane.b32.xlu0 %v524, 96
        %v746 = vpop.permute.xlu0 %745
        %747 = vrot.lane.b32.xlu0 %v525, 96
        %v748 = vpop.permute.xlu0 %747
        %749 = vrot.lane.b32.xlu0 %v526, 96
        %v750 = vpop.permute.xlu0 %749
        %v752 = vsel %vm531, %v732, 0
        %v755 = vsel %vm531, %v734, 0
        %v758 = vsel %vm531, %v736, 0
        %v761 = vsel %vm531, %v738, 0
        %v764 = vsel %vm531, %v744, 0
        %v767 = vsel %vm531, %v746, 0
        %v770 = vsel %vm531, %v748, 0
        %v773 = vsel %vm531, %v750, 0
        %775 = vmatpush.bf16.xpose.msra.mxu0 0
        %776 = vmatpush.bf16.xpose.msra.mxu0 0
        %777 = vmatpush.bf16.xpose.msra.mxu0 0
        %778 = vmatpush.bf16.xpose.msra.mxu0 0
        %779 = vmatpush.bf16.xpose.msra.mxu0 %v773
        %780 = vmatpush.bf16.xpose.msra.mxu0 %v770
        %781 = vmatpush.bf16.xpose.msra.mxu0 %v767
        %782 = vmatpush.bf16.xpose.msra.mxu0 %v764
        %783 = vmatmul.bf16.gmra.mxu0 %v752
        %v784 = vpop.f32.mrf.mxu0
        %v785 = vadd.f32 0.0, %v784
        %v786 = vpop.f32.mrf.mxu0
        %v787 = vadd.f32 0.0, %v786
        %788 = vmatmul.bf16.gmra.mxu0 %v755
        %v789 = vpop.f32.mrf.mxu0
        %v790 = vadd.f32 0.0, %v789
        %v791 = vpop.f32.mrf.mxu0
        %v792 = vadd.f32 0.0, %v791
        %793 = vmatmul.bf16.gmra.mxu0 %v758
        %v794 = vpop.f32.mrf.mxu0
        %v795 = vadd.f32 0.0, %v794
        %v796 = vpop.f32.mrf.mxu0
        %v797 = vadd.f32 0.0, %v796
        %798 = vmatmul.bf16.gmra.mxu0 %v761
        %v799 = vpop.f32.mrf.mxu0
        %v800 = vadd.f32 0.0, %v799
        %v801 = vpop.f32.mrf.mxu0
        %v802 = vadd.f32 0.0, %v801
        %803 = vdwg.mxu0
        %v804 = vsel %vm585, %v785, -inf
        %805 = vmax.xlane.f32.xlu0 %v804
        %v806 = vpop.xlane.xlu0 %805
        %v807 = vsel %vm585, %v787, -inf
        %808 = vmax.xlane.f32.xlu0 %v807
        %v809 = vpop.xlane.xlu0 %808
        %v810 = vsel %vm585, %v790, -inf
        %811 = vmax.xlane.f32.xlu0 %v810
        %v812 = vpop.xlane.xlu0 %811
        %v813 = vsel %vm585, %v792, -inf
        %814 = vmax.xlane.f32.xlu0 %v813
        %v815 = vpop.xlane.xlu0 %814
        %v816 = vsel %vm585, %v795, -inf
        %817 = vmax.xlane.f32.xlu0 %v816
        %v818 = vpop.xlane.xlu0 %817
        %v819 = vsel %vm585, %v797, -inf
        %820 = vmax.xlane.f32.xlu0 %v819
        %v821 = vpop.xlane.xlu0 %820
        %v822 = vsel %vm585, %v800, -inf
        %823 = vmax.xlane.f32.xlu0 %v822
        %v824 = vpop.xlane.xlu0 %823
        %v825 = vsel %vm585, %v802, -inf
        %826 = vmax.xlane.f32.xlu0 %v825
        %v827 = vpop.xlane.xlu0 %826
        %v828 = vsub.f32 %v785, %v806
        %v829 = vsub.f32 %v787, %v809
        %v830 = vsub.f32 %v790, %v812
        %v831 = vsub.f32 %v792, %v815
        %v832 = vsub.f32 %v795, %v818
        %v833 = vsub.f32 %v797, %v821
        %v834 = vsub.f32 %v800, %v824
        %v835 = vsub.f32 %v802, %v827
        %v836 = vmul.f32 %v828, 1.442695
        %v837 = vpow.pop %v836
        %v838 = vmul.f32 %v829, 1.442695
        %v839 = vpow.pop %v838
        %v840 = vmul.f32 %v830, 1.442695
        %v841 = vpow.pop %v840
        %v842 = vmul.f32 %v831, 1.442695
        %v843 = vpow.pop %v842
        %v844 = vmul.f32 %v832, 1.442695
        %v845 = vpow.pop %v844
        %v846 = vmul.f32 %v833, 1.442695
        %v847 = vpow.pop %v846
        %v848 = vmul.f32 %v834, 1.442695
        %v849 = vpow.pop %v848
        %v850 = vmul.f32 %v835, 1.442695
        %v851 = vpow.pop %v850
        %v852 = vsel %vm585, %v837, 0.0
        %853 = vadd.xlane.f32.xlu0 %v852
        %v854 = vpop.xlane.xlu0 %853
        %v855 = vsel %vm585, %v839, 0.0
        %856 = vadd.xlane.f32.xlu0 %v855
        %v857 = vpop.xlane.xlu0 %856
        %v858 = vsel %vm585, %v841, 0.0
        %859 = vadd.xlane.f32.xlu0 %v858
        %v860 = vpop.xlane.xlu0 %859
        %v861 = vsel %vm585, %v843, 0.0
        %862 = vadd.xlane.f32.xlu0 %v861
        %v863 = vpop.xlane.xlu0 %862
        %v864 = vsel %vm585, %v845, 0.0
        %865 = vadd.xlane.f32.xlu0 %v864
        %v866 = vpop.xlane.xlu0 %865
        %v867 = vsel %vm585, %v847, 0.0
        %868 = vadd.xlane.f32.xlu0 %v867
        %v869 = vpop.xlane.xlu0 %868
        %v870 = vsel %vm585, %v849, 0.0
        %871 = vadd.xlane.f32.xlu0 %v870
        %v872 = vpop.xlane.xlu0 %871
        %v873 = vsel %vm585, %v851, 0.0
        %874 = vadd.xlane.f32.xlu0 %v873
        %v875 = vpop.xlane.xlu0 %874
        %v876 = vrcp.pop %v854
        %v877 = vrcp.pop %v857
        %v878 = vrcp.pop %v860
        %v879 = vrcp.pop %v863
        %v880 = vrcp.pop %v866
        %v881 = vrcp.pop %v869
        %v882 = vrcp.pop %v872
        %v883 = vrcp.pop %v875
        %v884 = vmul.f32 %v837, %v876
        %v885 = vmul.f32 %v839, %v877
        %v886 = vmul.f32 %v841, %v878
        %v887 = vmul.f32 %v843, %v879
        %v888 = vmul.f32 %v845, %v880
        %v889 = vmul.f32 %v847, %v881
        %v890 = vmul.f32 %v849, %v882
        %v891 = vmul.f32 %v851, %v883
        %v892 = vpack.c.bf16 %v885, %v884
        %v893 = vpack.c.bf16 %v887, %v886
        %v894 = vpack.c.bf16 %v889, %v888
        %v895 = vpack.c.bf16 %v891, %v890
        %900 = vrot.lane.b32.xlu0 %v527, 96
        %v901 = vpop.permute.xlu0 %900
        %902 = vrot.lane.b32.xlu0 %v528, 96
        %v903 = vpop.permute.xlu0 %902
        %904 = vrot.lane.b32.xlu0 %v529, 96
        %v905 = vpop.permute.xlu0 %904
        %906 = vrot.lane.b32.xlu0 %v530, 96
        %v907 = vpop.permute.xlu0 %906
        %v913 = vsel %vm585, %v892, 0
        %v916 = vsel %vm585, %v893, 0
        %v919 = vsel %vm585, %v894, 0
        %v922 = vsel %vm585, %v895, 0
        %924 = vmatpush.bf16.msra.mxu0 0
        %925 = vmatpush.bf16.msra.mxu0 0
        %926 = vmatpush.bf16.msra.mxu0 0
        %927 = vmatpush.bf16.msra.mxu0 0
        %928 = vmatpush.bf16.msra.mxu0 %v907
        %929 = vmatpush.bf16.msra.mxu0 %v905
        %930 = vmatpush.bf16.msra.mxu0 %v903
        %931 = vmatpush.bf16.msra.mxu0 %v901
        %932 = vmatmul.bf16.gmra.mxu0 %v913
        %v933 = vpop.f32.mrf.mxu0
        %v934 = vadd.f32 0.0, %v933
        %v935 = vpop.f32.mrf.mxu0
        %v936 = vadd.f32 0.0, %v935
        %937 = vmatmul.bf16.gmra.mxu0 %v916
        %v938 = vpop.f32.mrf.mxu0
        %v939 = vadd.f32 0.0, %v938
        %v940 = vpop.f32.mrf.mxu0
        %v941 = vadd.f32 0.0, %v940
        %942 = vmatmul.bf16.gmra.mxu0 %v919
        %v943 = vpop.f32.mrf.mxu0
        %v944 = vadd.f32 0.0, %v943
        %v945 = vpop.f32.mrf.mxu0
        %v946 = vadd.f32 0.0, %v945
        %947 = vmatmul.bf16.gmra.mxu0 %v922
        %v948 = vpop.f32.mrf.mxu0
        %v949 = vadd.f32 0.0, %v948
        %v950 = vpop.f32.mrf.mxu0
        %v951 = vadd.f32 0.0, %v950
        %952 = vdwg.mxu0
        %v953 = vpack.c.bf16 %v936, %v934
        %v954 = vpack.c.bf16 %v941, %v939
        %v955 = vpack.c.bf16 %v946, %v944
        %v956 = vpack.c.bf16 %v951, %v949
        %v957 = vld [vmem:[#allocation7 + $0x10] sm:$0xf]
        %v958 = vld [vmem:[#allocation7 + $0x14] sm:$0xf]
        %v959 = vld [vmem:[#allocation7 + $0x18] sm:$0xf]
        %v960 = vld [vmem:[#allocation7 + $0x1c] sm:$0xf]
        %v965 = vunpack.c.l.b16 %v957
        %v966 = vunpack.c.l.b16 %v958
        %v967 = vunpack.c.l.b16 %v959
        %v968 = vunpack.c.l.b16 %v960
        %v969 = vpack.c.b16 %v966, %v965
        %v970 = vpack.c.b16 %v968, %v967
        %v974 = vsel %vm531, %v953, 0
        %v977 = vsel %vm531, %v954, 0
        %v980 = vsel %vm531, %v955, 0
        %v983 = vsel %vm531, %v956, 0
        %985 = vmatpush.bf16.msra.mxu0 0
        %986 = vmatpush.bf16.msra.mxu0 0
        %987 = vmatpush.bf16.msra.mxu0 0
        %988 = vmatpush.bf16.msra.mxu0 0
        %989 = vmatpush.bf16.msra.mxu0 0
        %990 = vmatpush.bf16.msra.mxu0 0
        %991 = vmatpush.bf16.msra.mxu0 %v970
        %992 = vmatpush.bf16.msra.mxu0 %v969
        %993 = vmatmul.bf16.gmra.mxu0 %v974
        %v994 = vpop.f32.mrf.mxu0
        %v995 = vadd.f32 0.0, %v994
        %v996 = vpop.f32.mrf.mxu0
        %v997 = vadd.f32 0.0, %v996
        %998 = vmatmul.bf16.gmra.mxu0 %v977
        %v999 = vpop.f32.mrf.mxu0
        %v1000 = vadd.f32 0.0, %v999
        %v1001 = vpop.f32.mrf.mxu0
        %v1002 = vadd.f32 0.0, %v1001
        %1003 = vmatmul.bf16.gmra.mxu0 %v980
        %v1004 = vpop.f32.mrf.mxu0
        %v1005 = vadd.f32 0.0, %v1004
        %v1006 = vpop.f32.mrf.mxu0
        %v1007 = vadd.f32 0.0, %v1006
        %1008 = vmatmul.bf16.gmra.mxu0 %v983
        %v1009 = vpop.f32.mrf.mxu0
        %v1010 = vadd.f32 0.0, %v1009
        %v1011 = vpop.f32.mrf.mxu0
        %v1012 = vadd.f32 0.0, %v1011
        %1013 = vdwg.mxu0
        %v1018 = vunpack.c.l.b16 %v723
        %v1019 = vunpack.c.l.b16 %v724
        %v1020 = vunpack.c.l.b16 %v725
        %v1021 = vunpack.c.l.b16 %v726
        %v1022 = vpack.c.b16 %v1019, %v1018
        %v1023 = vpack.c.b16 %v1021, %v1020
        %v1027 = vsel %vm531, %v719, 0
        %v1030 = vsel %vm531, %v720, 0
        %v1033 = vsel %vm531, %v721, 0
        %v1036 = vsel %vm531, %v722, 0
        %1038 = vmatpush.bf16.msra.mxu0 0
        %1039 = vmatpush.bf16.msra.mxu0 0
        %1040 = vmatpush.bf16.msra.mxu0 0
        %1041 = vmatpush.bf16.msra.mxu0 0
        %1042 = vmatpush.bf16.msra.mxu0 0
        %1043 = vmatpush.bf16.msra.mxu0 0
        %1044 = vmatpush.bf16.msra.mxu0 %v1023
        %1045 = vmatpush.bf16.msra.mxu0 %v1022
        %1046 = vmatmul.bf16.gmra.mxu0 %v1027
        %v1047 = vpop.f32.mrf.mxu0
        %v1048 = vadd.f32 %v995, %v1047
        %v1049 = vpop.f32.mrf.mxu0
        %v1050 = vadd.f32 %v997, %v1049
        %1051 = vmatmul.bf16.gmra.mxu0 %v1030
        %v1052 = vpop.f32.mrf.mxu0
        %v1053 = vadd.f32 %v1000, %v1052
        %v1054 = vpop.f32.mrf.mxu0
        %v1055 = vadd.f32 %v1002, %v1054
        %1056 = vmatmul.bf16.gmra.mxu0 %v1033
        %v1057 = vpop.f32.mrf.mxu0
        %v1058 = vadd.f32 %v1005, %v1057
        %v1059 = vpop.f32.mrf.mxu0
        %v1060 = vadd.f32 %v1007, %v1059
        %1061 = vmatmul.bf16.gmra.mxu0 %v1036
        %v1062 = vpop.f32.mrf.mxu0
        %v1063 = vadd.f32 %v1010, %v1062
        %v1064 = vpop.f32.mrf.mxu0
        %v1065 = vadd.f32 %v1012, %v1064
        %1066 = vdwg.mxu0
        %1067 = vrot.lane.b32.xlu0 %v519, 64
        %v1068 = vpop.permute.xlu0 %1067
        %1069 = vrot.lane.b32.xlu0 %v520, 64
        %v1070 = vpop.permute.xlu0 %1069
        %1071 = vrot.lane.b32.xlu0 %v521, 64
        %v1072 = vpop.permute.xlu0 %1071
        %1073 = vrot.lane.b32.xlu0 %v522, 64
        %v1074 = vpop.permute.xlu0 %1073
        %1075 = vrot.lane.b32.xlu0 %v523, 64
        %v1076 = vpop.permute.xlu0 %1075
        %1077 = vrot.lane.b32.xlu0 %v524, 64
        %v1078 = vpop.permute.xlu0 %1077
        %1079 = vrot.lane.b32.xlu0 %v525, 64
        %v1080 = vpop.permute.xlu0 %1079
        %1081 = vrot.lane.b32.xlu0 %v526, 64
        %v1082 = vpop.permute.xlu0 %1081
        %v1084 = vsel %vm531, %v1068, 0
        %v1087 = vsel %vm531, %v1070, 0
        %v1090 = vsel %vm531, %v1072, 0
        %v1093 = vsel %vm531, %v1074, 0
        %v1096 = vsel %vm531, %v1076, 0
        %v1099 = vsel %vm531, %v1078, 0
        %v1102 = vsel %vm531, %v1080, 0
        %v1105 = vsel %vm531, %v1082, 0
        %1107 = vmatpush.bf16.xpose.msra.mxu0 0
        %1108 = vmatpush.bf16.xpose.msra.mxu0 0
        %1109 = vmatpush.bf16.xpose.msra.mxu0 0
        %1110 = vmatpush.bf16.xpose.msra.mxu0 0
        %1111 = vmatpush.bf16.xpose.msra.mxu0 %v1105
        %1112 = vmatpush.bf16.xpose.msra.mxu0 %v1102
        %1113 = vmatpush.bf16.xpose.msra.mxu0 %v1099
        %1114 = vmatpush.bf16.xpose.msra.mxu0 %v1096
        %1115 = vmatmul.bf16.gmra.mxu0 %v1084
        %v1116 = vpop.f32.mrf.mxu0
        %v1117 = vadd.f32 0.0, %v1116
        %v1118 = vpop.f32.mrf.mxu0
        %v1119 = vadd.f32 0.0, %v1118
        %1120 = vmatmul.bf16.gmra.mxu0 %v1087
        %v1121 = vpop.f32.mrf.mxu0
        %v1122 = vadd.f32 0.0, %v1121
        %v1123 = vpop.f32.mrf.mxu0
        %v1124 = vadd.f32 0.0, %v1123
        %1125 = vmatmul.bf16.gmra.mxu0 %v1090
        %v1126 = vpop.f32.mrf.mxu0
        %v1127 = vadd.f32 0.0, %v1126
        %v1128 = vpop.f32.mrf.mxu0
        %v1129 = vadd.f32 0.0, %v1128
        %1130 = vmatmul.bf16.gmra.mxu0 %v1093
        %v1131 = vpop.f32.mrf.mxu0
        %v1132 = vadd.f32 0.0, %v1131
        %v1133 = vpop.f32.mrf.mxu0
        %v1134 = vadd.f32 0.0, %v1133
        %1135 = vdwg.mxu0
        %v1136 = vsel %vm585, %v1117, -inf
        %1137 = vmax.xlane.f32.xlu0 %v1136
        %v1138 = vpop.xlane.xlu0 %1137
        %v1139 = vsel %vm585, %v1119, -inf
        %1140 = vmax.xlane.f32.xlu0 %v1139
        %v1141 = vpop.xlane.xlu0 %1140
        %v1142 = vsel %vm585, %v1122, -inf
        %1143 = vmax.xlane.f32.xlu0 %v1142
        %v1144 = vpop.xlane.xlu0 %1143
        %v1145 = vsel %vm585, %v1124, -inf
        %1146 = vmax.xlane.f32.xlu0 %v1145
        %v1147 = vpop.xlane.xlu0 %1146
        %v1148 = vsel %vm585, %v1127, -inf
        %1149 = vmax.xlane.f32.xlu0 %v1148
        %v1150 = vpop.xlane.xlu0 %1149
        %v1151 = vsel %vm585, %v1129, -inf
        %1152 = vmax.xlane.f32.xlu0 %v1151
        %v1153 = vpop.xlane.xlu0 %1152
        %v1154 = vsel %vm585, %v1132, -inf
        %1155 = vmax.xlane.f32.xlu0 %v1154
        %v1156 = vpop.xlane.xlu0 %1155
        %v1157 = vsel %vm585, %v1134, -inf
        %1158 = vmax.xlane.f32.xlu0 %v1157
        %v1159 = vpop.xlane.xlu0 %1158
        %v1160 = vsub.f32 %v1117, %v1138
        %v1161 = vsub.f32 %v1119, %v1141
        %v1162 = vsub.f32 %v1122, %v1144
        %v1163 = vsub.f32 %v1124, %v1147
        %v1164 = vsub.f32 %v1127, %v1150
        %v1165 = vsub.f32 %v1129, %v1153
        %v1166 = vsub.f32 %v1132, %v1156
        %v1167 = vsub.f32 %v1134, %v1159
        %v1168 = vmul.f32 %v1160, 1.442695
        %v1169 = vpow.pop %v1168
        %v1170 = vmul.f32 %v1161, 1.442695
        %v1171 = vpow.pop %v1170
        %v1172 = vmul.f32 %v1162, 1.442695
        %v1173 = vpow.pop %v1172
        %v1174 = vmul.f32 %v1163, 1.442695
        %v1175 = vpow.pop %v1174
        %v1176 = vmul.f32 %v1164, 1.442695
        %v1177 = vpow.pop %v1176
        %v1178 = vmul.f32 %v1165, 1.442695
        %v1179 = vpow.pop %v1178
        %v1180 = vmul.f32 %v1166, 1.442695
        %v1181 = vpow.pop %v1180
        %v1182 = vmul.f32 %v1167, 1.442695
        %v1183 = vpow.pop %v1182
        %v1184 = vsel %vm585, %v1169, 0.0
        %1185 = vadd.xlane.f32.xlu0 %v1184
        %v1186 = vpop.xlane.xlu0 %1185
        %v1187 = vsel %vm585, %v1171, 0.0
        %1188 = vadd.xlane.f32.xlu0 %v1187
        %v1189 = vpop.xlane.xlu0 %1188
        %v1190 = vsel %vm585, %v1173, 0.0
        %1191 = vadd.xlane.f32.xlu0 %v1190
        %v1192 = vpop.xlane.xlu0 %1191
        %v1193 = vsel %vm585, %v1175, 0.0
        %1194 = vadd.xlane.f32.xlu0 %v1193
        %v1195 = vpop.xlane.xlu0 %1194
        %v1196 = vsel %vm585, %v1177, 0.0
        %1197 = vadd.xlane.f32.xlu0 %v1196
        %v1198 = vpop.xlane.xlu0 %1197
        %v1199 = vsel %vm585, %v1179, 0.0
        %1200 = vadd.xlane.f32.xlu0 %v1199
        %v1201 = vpop.xlane.xlu0 %1200
        %v1202 = vsel %vm585, %v1181, 0.0
        %1203 = vadd.xlane.f32.xlu0 %v1202
        %v1204 = vpop.xlane.xlu0 %1203
        %v1205 = vsel %vm585, %v1183, 0.0
        %1206 = vadd.xlane.f32.xlu0 %v1205
        %v1207 = vpop.xlane.xlu0 %1206
        %v1208 = vrcp.pop %v1186
        %v1209 = vrcp.pop %v1189
        %v1210 = vrcp.pop %v1192
        %v1211 = vrcp.pop %v1195
        %v1212 = vrcp.pop %v1198
        %v1213 = vrcp.pop %v1201
        %v1214 = vrcp.pop %v1204
        %v1215 = vrcp.pop %v1207
        %v1216 = vmul.f32 %v1169, %v1208
        %v1217 = vmul.f32 %v1171, %v1209
        %v1218 = vmul.f32 %v1173, %v1210
        %v1219 = vmul.f32 %v1175, %v1211
        %v1220 = vmul.f32 %v1177, %v1212
        %v1221 = vmul.f32 %v1179, %v1213
        %v1222 = vmul.f32 %v1181, %v1214
        %v1223 = vmul.f32 %v1183, %v1215
        %v1224 = vpack.c.bf16 %v1217, %v1216
        %v1225 = vpack.c.bf16 %v1219, %v1218
        %v1226 = vpack.c.bf16 %v1221, %v1220
        %v1227 = vpack.c.bf16 %v1223, %v1222
        %1228 = vrot.lane.b32.xlu0 %v527, 64
        %v1229 = vpop.permute.xlu0 %1228
        %1230 = vrot.lane.b32.xlu0 %v528, 64
        %v1231 = vpop.permute.xlu0 %1230
        %1232 = vrot.lane.b32.xlu0 %v529, 64
        %v1233 = vpop.permute.xlu0 %1232
        %1234 = vrot.lane.b32.xlu0 %v530, 64
        %v1235 = vpop.permute.xlu0 %1234
        %v1241 = vsel %vm585, %v1224, 0
        %v1244 = vsel %vm585, %v1225, 0
        %v1247 = vsel %vm585, %v1226, 0
        %v1250 = vsel %vm585, %v1227, 0
        %1252 = vmatpush.bf16.msra.mxu0 0
        %1253 = vmatpush.bf16.msra.mxu0 0
        %1254 = vmatpush.bf16.msra.mxu0 0
        %1255 = vmatpush.bf16.msra.mxu0 0
        %1256 = vmatpush.bf16.msra.mxu0 %v1235
        %1257 = vmatpush.bf16.msra.mxu0 %v1233
        %1258 = vmatpush.bf16.msra.mxu0 %v1231
        %1259 = vmatpush.bf16.msra.mxu0 %v1229
        %1260 = vmatmul.bf16.gmra.mxu0 %v1241
        %v1261 = vpop.f32.mrf.mxu0
        %v1262 = vadd.f32 0.0, %v1261
        %v1263 = vpop.f32.mrf.mxu0
        %v1264 = vadd.f32 0.0, %v1263
        %1265 = vmatmul.bf16.gmra.mxu0 %v1244
        %v1266 = vpop.f32.mrf.mxu0
        %v1267 = vadd.f32 0.0, %v1266
        %v1268 = vpop.f32.mrf.mxu0
        %v1269 = vadd.f32 0.0, %v1268
        %1270 = vmatmul.bf16.gmra.mxu0 %v1247
        %v1271 = vpop.f32.mrf.mxu0
        %v1272 = vadd.f32 0.0, %v1271
        %v1273 = vpop.f32.mrf.mxu0
        %v1274 = vadd.f32 0.0, %v1273
        %1275 = vmatmul.bf16.gmra.mxu0 %v1250
        %v1276 = vpop.f32.mrf.mxu0
        %v1277 = vadd.f32 0.0, %v1276
        %v1278 = vpop.f32.mrf.mxu0
        %v1279 = vadd.f32 0.0, %v1278
        %1280 = vdwg.mxu0
        %v1281 = vpack.c.bf16 %v1264, %v1262
        %v1282 = vpack.c.bf16 %v1269, %v1267
        %v1283 = vpack.c.bf16 %v1274, %v1272
        %v1284 = vpack.c.bf16 %v1279, %v1277
        %v1285 = vld [vmem:[#allocation7 + $0x20] sm:$0xf]
        %v1286 = vld [vmem:[#allocation7 + $0x24] sm:$0xf]
        %v1287 = vld [vmem:[#allocation7 + $0x28] sm:$0xf]
        %v1288 = vld [vmem:[#allocation7 + $0x2c] sm:$0xf]
        %v1293 = vunpack.c.l.b16 %v1285
        %v1294 = vunpack.c.l.b16 %v1286
        %v1295 = vunpack.c.l.b16 %v1287
        %v1296 = vunpack.c.l.b16 %v1288
        %v1297 = vpack.c.b16 %v1294, %v1293
        %v1298 = vpack.c.b16 %v1296, %v1295
        %v1302 = vsel %vm531, %v1281, 0
        %v1305 = vsel %vm531, %v1282, 0
        %v1308 = vsel %vm531, %v1283, 0
        %v1311 = vsel %vm531, %v1284, 0
        %1313 = vmatpush.bf16.msra.mxu0 0
        %1314 = vmatpush.bf16.msra.mxu0 0
        %1315 = vmatpush.bf16.msra.mxu0 0
        %1316 = vmatpush.bf16.msra.mxu0 0
        %1317 = vmatpush.bf16.msra.mxu0 0
        %1318 = vmatpush.bf16.msra.mxu0 0
        %1319 = vmatpush.bf16.msra.mxu0 %v1298
        %1320 = vmatpush.bf16.msra.mxu0 %v1297
        %1321 = vmatmul.bf16.gmra.mxu0 %v1302
        %v1322 = vpop.f32.mrf.mxu0
        %v1323 = vadd.f32 0.0, %v1322
        %v1324 = vpop.f32.mrf.mxu0
        %v1325 = vadd.f32 0.0, %v1324
        %1326 = vmatmul.bf16.gmra.mxu0 %v1305
        %v1327 = vpop.f32.mrf.mxu0
        %v1328 = vadd.f32 0.0, %v1327
        %v1329 = vpop.f32.mrf.mxu0
        %v1330 = vadd.f32 0.0, %v1329
        %1331 = vmatmul.bf16.gmra.mxu0 %v1308
        %v1332 = vpop.f32.mrf.mxu0
        %v1333 = vadd.f32 0.0, %v1332
        %v1334 = vpop.f32.mrf.mxu0
        %v1335 = vadd.f32 0.0, %v1334
        %1336 = vmatmul.bf16.gmra.mxu0 %v1311
        %v1337 = vpop.f32.mrf.mxu0
        %v1338 = vadd.f32 0.0, %v1337
        %v1339 = vpop.f32.mrf.mxu0
        %v1340 = vadd.f32 0.0, %v1339
        %1341 = vdwg.mxu0
        %v1342 = vadd.f32 %v1048, %v1323
        %v1343 = vadd.f32 %v1050, %v1325
        %v1344 = vadd.f32 %v1053, %v1328
        %v1345 = vadd.f32 %v1055, %v1330
        %v1346 = vadd.f32 %v1058, %v1333
        %v1347 = vadd.f32 %v1060, %v1335
        %v1348 = vadd.f32 %v1063, %v1338
        %v1349 = vadd.f32 %v1065, %v1340
        %1350 = vrot.lane.b32.xlu0 %v519, 32
        %v1351 = vpop.permute.xlu0 %1350
        %1352 = vrot.lane.b32.xlu0 %v520, 32
        %v1353 = vpop.permute.xlu0 %1352
        %1354 = vrot.lane.b32.xlu0 %v521, 32
        %v1355 = vpop.permute.xlu0 %1354
        %1356 = vrot.lane.b32.xlu0 %v522, 32
        %v1357 = vpop.permute.xlu0 %1356
        %1358 = vrot.lane.b32.xlu0 %v523, 32
        %v1359 = vpop.permute.xlu0 %1358
        %1360 = vrot.lane.b32.xlu0 %v524, 32
        %v1361 = vpop.permute.xlu0 %1360
        %1362 = vrot.lane.b32.xlu0 %v525, 32
        %v1363 = vpop.permute.xlu0 %1362
        %1364 = vrot.lane.b32.xlu0 %v526, 32
        %v1365 = vpop.permute.xlu0 %1364
        %v1367 = vsel %vm531, %v1351, 0
        %v1370 = vsel %vm531, %v1353, 0
        %v1373 = vsel %vm531, %v1355, 0
        %v1376 = vsel %vm531, %v1357, 0
        %v1379 = vsel %vm531, %v1359, 0
        %v1382 = vsel %vm531, %v1361, 0
        %v1385 = vsel %vm531, %v1363, 0
        %v1388 = vsel %vm531, %v1365, 0
        %1390 = vmatpush.bf16.xpose.msra.mxu0 0
        %1391 = vmatpush.bf16.xpose.msra.mxu0 0
        %1392 = vmatpush.bf16.xpose.msra.mxu0 0
        %1393 = vmatpush.bf16.xpose.msra.mxu0 0
        %1394 = vmatpush.bf16.xpose.msra.mxu0 %v1388
        %1395 = vmatpush.bf16.xpose.msra.mxu0 %v1385
        %1396 = vmatpush.bf16.xpose.msra.mxu0 %v1382
        %1397 = vmatpush.bf16.xpose.msra.mxu0 %v1379
        %1398 = vmatmul.bf16.gmra.mxu0 %v1367
        %v1399 = vpop.f32.mrf.mxu0
        %v1400 = vadd.f32 0.0, %v1399
        %v1401 = vpop.f32.mrf.mxu0
        %v1402 = vadd.f32 0.0, %v1401
        %1403 = vmatmul.bf16.gmra.mxu0 %v1370
        %v1404 = vpop.f32.mrf.mxu0
        %v1405 = vadd.f32 0.0, %v1404
        %v1406 = vpop.f32.mrf.mxu0
        %v1407 = vadd.f32 0.0, %v1406
        %1408 = vmatmul.bf16.gmra.mxu0 %v1373
        %v1409 = vpop.f32.mrf.mxu0
        %v1410 = vadd.f32 0.0, %v1409
        %v1411 = vpop.f32.mrf.mxu0
        %v1412 = vadd.f32 0.0, %v1411
        %1413 = vmatmul.bf16.gmra.mxu0 %v1376
        %v1414 = vpop.f32.mrf.mxu0
        %v1415 = vadd.f32 0.0, %v1414
        %v1416 = vpop.f32.mrf.mxu0
        %v1417 = vadd.f32 0.0, %v1416
        %1418 = vdwg.mxu0
        %v1419 = vsel %vm585, %v1400, -inf
        %1420 = vmax.xlane.f32.xlu0 %v1419
        %v1421 = vpop.xlane.xlu0 %1420
        %v1422 = vsel %vm585, %v1402, -inf
        %1423 = vmax.xlane.f32.xlu0 %v1422
        %v1424 = vpop.xlane.xlu0 %1423
        %v1425 = vsel %vm585, %v1405, -inf
        %1426 = vmax.xlane.f32.xlu0 %v1425
        %v1427 = vpop.xlane.xlu0 %1426
        %v1428 = vsel %vm585, %v1407, -inf
        %1429 = vmax.xlane.f32.xlu0 %v1428
        %v1430 = vpop.xlane.xlu0 %1429
        %v1431 = vsel %vm585, %v1410, -inf
        %1432 = vmax.xlane.f32.xlu0 %v1431
        %v1433 = vpop.xlane.xlu0 %1432
        %v1434 = vsel %vm585, %v1412, -inf
        %1435 = vmax.xlane.f32.xlu0 %v1434
        %v1436 = vpop.xlane.xlu0 %1435
        %v1437 = vsel %vm585, %v1415, -inf
        %1438 = vmax.xlane.f32.xlu0 %v1437
        %v1439 = vpop.xlane.xlu0 %1438
        %v1440 = vsel %vm585, %v1417, -inf
        %1441 = vmax.xlane.f32.xlu0 %v1440
        %v1442 = vpop.xlane.xlu0 %1441
        %v1443 = vsub.f32 %v1400, %v1421
        %v1444 = vsub.f32 %v1402, %v1424
        %v1445 = vsub.f32 %v1405, %v1427
        %v1446 = vsub.f32 %v1407, %v1430
        %v1447 = vsub.f32 %v1410, %v1433
        %v1448 = vsub.f32 %v1412, %v1436
        %v1449 = vsub.f32 %v1415, %v1439
        %v1450 = vsub.f32 %v1417, %v1442
        %v1451 = vmul.f32 %v1443, 1.442695
        %v1452 = vpow.pop %v1451
        %v1453 = vmul.f32 %v1444, 1.442695
        %v1454 = vpow.pop %v1453
        %v1455 = vmul.f32 %v1445, 1.442695
        %v1456 = vpow.pop %v1455
        %v1457 = vmul.f32 %v1446, 1.442695
        %v1458 = vpow.pop %v1457
        %v1459 = vmul.f32 %v1447, 1.442695
        %v1460 = vpow.pop %v1459
        %v1461 = vmul.f32 %v1448, 1.442695
        %v1462 = vpow.pop %v1461
        %v1463 = vmul.f32 %v1449, 1.442695
        %v1464 = vpow.pop %v1463
        %v1465 = vmul.f32 %v1450, 1.442695
        %v1466 = vpow.pop %v1465
        %v1467 = vsel %vm585, %v1452, 0.0
        %1468 = vadd.xlane.f32.xlu0 %v1467
        %v1469 = vpop.xlane.xlu0 %1468
        %v1470 = vsel %vm585, %v1454, 0.0
        %1471 = vadd.xlane.f32.xlu0 %v1470
        %v1472 = vpop.xlane.xlu0 %1471
        %v1473 = vsel %vm585, %v1456, 0.0
        %1474 = vadd.xlane.f32.xlu0 %v1473
        %v1475 = vpop.xlane.xlu0 %1474
        %v1476 = vsel %vm585, %v1458, 0.0
        %1477 = vadd.xlane.f32.xlu0 %v1476
        %v1478 = vpop.xlane.xlu0 %1477
        %v1479 = vsel %vm585, %v1460, 0.0
        %1480 = vadd.xlane.f32.xlu0 %v1479
        %v1481 = vpop.xlane.xlu0 %1480
        %v1482 = vsel %vm585, %v1462, 0.0
        %1483 = vadd.xlane.f32.xlu0 %v1482
        %v1484 = vpop.xlane.xlu0 %1483
        %v1485 = vsel %vm585, %v1464, 0.0
        %1486 = vadd.xlane.f32.xlu0 %v1485
        %v1487 = vpop.xlane.xlu0 %1486
        %v1488 = vsel %vm585, %v1466, 0.0
        %1489 = vadd.xlane.f32.xlu0 %v1488
        %v1490 = vpop.xlane.xlu0 %1489
        %v1491 = vrcp.pop %v1469
        %v1492 = vrcp.pop %v1472
        %v1493 = vrcp.pop %v1475
        %v1494 = vrcp.pop %v1478
        %v1495 = vrcp.pop %v1481
        %v1496 = vrcp.pop %v1484
        %v1497 = vrcp.pop %v1487
        %v1498 = vrcp.pop %v1490
        %v1499 = vmul.f32 %v1452, %v1491
        %v1500 = vmul.f32 %v1454, %v1492
        %v1501 = vmul.f32 %v1456, %v1493
        %v1502 = vmul.f32 %v1458, %v1494
        %v1503 = vmul.f32 %v1460, %v1495
        %v1504 = vmul.f32 %v1462, %v1496
        %v1505 = vmul.f32 %v1464, %v1497
        %v1506 = vmul.f32 %v1466, %v1498
        %v1507 = vpack.c.bf16 %v1500, %v1499
        %v1508 = vpack.c.bf16 %v1502, %v1501
        %v1509 = vpack.c.bf16 %v1504, %v1503
        %v1510 = vpack.c.bf16 %v1506, %v1505
        %1511 = vrot.lane.b32.xlu0 %v527, 32
        %v1512 = vpop.permute.xlu0 %1511
        %1513 = vrot.lane.b32.xlu0 %v528, 32
        %v1514 = vpop.permute.xlu0 %1513
        %1515 = vrot.lane.b32.xlu0 %v529, 32
        %v1516 = vpop.permute.xlu0 %1515
        %1517 = vrot.lane.b32.xlu0 %v530, 32
        %v1518 = vpop.permute.xlu0 %1517
        %v1524 = vsel %vm585, %v1507, 0
        %v1527 = vsel %vm585, %v1508, 0
        %v1530 = vsel %vm585, %v1509, 0
        %v1533 = vsel %vm585, %v1510, 0
        %1535 = vmatpush.bf16.msra.mxu0 0
        %1536 = vmatpush.bf16.msra.mxu0 0
        %1537 = vmatpush.bf16.msra.mxu0 0
        %1538 = vmatpush.bf16.msra.mxu0 0
        %1539 = vmatpush.bf16.msra.mxu0 %v1518
        %1540 = vmatpush.bf16.msra.mxu0 %v1516
        %1541 = vmatpush.bf16.msra.mxu0 %v1514
        %1542 = vmatpush.bf16.msra.mxu0 %v1512
        %1543 = vmatmul.bf16.gmra.mxu0 %v1524
        %v1544 = vpop.f32.mrf.mxu0
        %v1545 = vadd.f32 0.0, %v1544
        %v1546 = vpop.f32.mrf.mxu0
        %v1547 = vadd.f32 0.0, %v1546
        %1548 = vmatmul.bf16.gmra.mxu0 %v1527
        %v1549 = vpop.f32.mrf.mxu0
        %v1550 = vadd.f32 0.0, %v1549
        %v1551 = vpop.f32.mrf.mxu0
        %v1552 = vadd.f32 0.0, %v1551
        %1553 = vmatmul.bf16.gmra.mxu0 %v1530
        %v1554 = vpop.f32.mrf.mxu0
        %v1555 = vadd.f32 0.0, %v1554
        %v1556 = vpop.f32.mrf.mxu0
        %v1557 = vadd.f32 0.0, %v1556
        %1558 = vmatmul.bf16.gmra.mxu0 %v1533
        %v1559 = vpop.f32.mrf.mxu0
        %v1560 = vadd.f32 0.0, %v1559
        %v1561 = vpop.f32.mrf.mxu0
        %v1562 = vadd.f32 0.0, %v1561
        %1563 = vdwg.mxu0
        %v1564 = vpack.c.bf16 %v1547, %v1545
        %v1565 = vpack.c.bf16 %v1552, %v1550
        %v1566 = vpack.c.bf16 %v1557, %v1555
        %v1567 = vpack.c.bf16 %v1562, %v1560
        %v1568 = vld [vmem:[#allocation7 + $0x30] sm:$0xf]
        %v1569 = vld [vmem:[#allocation7 + $0x34] sm:$0xf]
        %v1570 = vld [vmem:[#allocation7 + $0x38] sm:$0xf]
        %v1571 = vld [vmem:[#allocation7 + $0x3c] sm:$0xf]
        %v1576 = vunpack.c.l.b16 %v1568
        %v1577 = vunpack.c.l.b16 %v1569
        %v1578 = vunpack.c.l.b16 %v1570
        %v1579 = vunpack.c.l.b16 %v1571
        %v1580 = vpack.c.b16 %v1577, %v1576
        %v1581 = vpack.c.b16 %v1579, %v1578
        %v1585 = vsel %vm531, %v1564, 0
        %v1588 = vsel %vm531, %v1565, 0
        %v1591 = vsel %vm531, %v1566, 0
        %v1594 = vsel %vm531, %v1567, 0
        %1596 = vmatpush.bf16.msra.mxu0 0
        %1597 = vmatpush.bf16.msra.mxu0 0
        %1598 = vmatpush.bf16.msra.mxu0 0
        %1599 = vmatpush.bf16.msra.mxu0 0
        %1600 = vmatpush.bf16.msra.mxu0 0
        %1601 = vmatpush.bf16.msra.mxu0 0
        %1602 = vmatpush.bf16.msra.mxu0 %v1581
        %1603 = vmatpush.bf16.msra.mxu0 %v1580
        %1604 = vmatmul.bf16.gmra.mxu0 %v1585
        %v1605 = vpop.f32.mrf.mxu0
        %v1606 = vadd.f32 0.0, %v1605
        %v1607 = vpop.f32.mrf.mxu0
        %v1608 = vadd.f32 0.0, %v1607
        %1609 = vmatmul.bf16.gmra.mxu0 %v1588
        %v1610 = vpop.f32.mrf.mxu0
        %v1611 = vadd.f32 0.0, %v1610
        %v1612 = vpop.f32.mrf.mxu0
        %v1613 = vadd.f32 0.0, %v1612
        %1614 = vmatmul.bf16.gmra.mxu0 %v1591
        %v1615 = vpop.f32.mrf.mxu0
        %v1616 = vadd.f32 0.0, %v1615
        %v1617 = vpop.f32.mrf.mxu0
        %v1618 = vadd.f32 0.0, %v1617
        %1619 = vmatmul.bf16.gmra.mxu0 %v1594
        %v1620 = vpop.f32.mrf.mxu0
        %v1621 = vadd.f32 0.0, %v1620
        %v1622 = vpop.f32.mrf.mxu0
        %v1623 = vadd.f32 0.0, %v1622
        %1624 = vdwg.mxu0
        %v1625 = vadd.f32 %v1342, %v1606
        %v1626 = vadd.f32 %v1343, %v1608
        %v1627 = vadd.f32 %v1344, %v1611
        %v1628 = vadd.f32 %v1345, %v1613
        %v1629 = vadd.f32 %v1346, %v1616
        %v1630 = vadd.f32 %v1347, %v1618
        %v1631 = vadd.f32 %v1348, %v1621
        %v1632 = vadd.f32 %v1349, %v1623
        %v1633 = vld [vmem:[%s3] sm:$0x1]
        %v1635 = vperm.slane %v1633, 0
        %v1637 = vadd.f32 %v1625, %v1635
        %v1638 = vadd.f32 %v1626, %v1635
        %v1639 = vadd.f32 %v1627, %v1635
        %v1640 = vadd.f32 %v1628, %v1635
        %v1641 = vadd.f32 %v1629, %v1635
        %v1642 = vadd.f32 %v1630, %v1635
        %v1643 = vadd.f32 %v1631, %v1635
        %v1644 = vadd.f32 %v1632, %v1635
        %1645 = vst [vmem:[%s250] sm:$0xff] %v1637
        %1646 = vst [vmem:[%s250 + $0x8] sm:$0xff] %v1638
        %1647 = vst [vmem:[%s250 + $0x10] sm:$0xff] %v1639
        %1648 = vst [vmem:[%s250 + $0x18] sm:$0xff] %v1640
        %1649 = vst [vmem:[%s250 + $0x20] sm:$0xff] %v1641
        %1650 = vst [vmem:[%s250 + $0x28] sm:$0xff] %v1642
        %1651 = vst [vmem:[%s250 + $0x30] sm:$0xff] %v1643
        %1652 = vst [vmem:[%s250 + $0x38] sm:$0xff] %v1644
        %s1653 = sand.u32 %s119, 1
        %s1654 = scalar_lea.sflag [#allocation4], %s1653
        %s1655 = sand.u32 %s119, 1
        %s1656 = smul.addr %s1655, 64
        %s1657 = scalar_lea.vmem [#allocation8], %s1656
        // Predicated region
        $region49: #{tpu_custom_call.1} parent=35 // pred_check
          %p1658 = pneg %p129
        $region50: #{tpu_custom_call.1} parent=35 // pred_check_branch
          %1660 = sbr.rel (%p1658) target = $region52
        $region51: #{tpu_custom_call.1} parent=35 // pred_region
          %1662 = vsyncadd %s1654, 0
          %s1663 = smul.addr %s22, 8
          %s1664 = smul.addr %s1663, 8
          %s1665 = scalar_lea.hbm %s4, %s1664
          %s1666 = sshll.u32 %s1657, 4
          %s1667 = int_to_ptr.vmem [resolvable:$true] %s1666
          %s1668 = sshll.u32 %s1665, 4
          %s1669 = int_to_ptr.hbm [resolvable:$true] %s1668
          %1674 = dma.vmem_to_hbm [thread:$0]  %s1667, 1024, %s1669, %s1654, 128, 128, 8
        $region52: #{tpu_custom_call.1} parent=35 // pred_fallthru
          _
      $region36: #{tpu_custom_call.1} parent=5 // pred_fallthru
        _
      %p1675 = scmp.le.s32.totalorder 2, %s17
      // Predicated region
      $region53: #{tpu_custom_call.1} parent=5 // pred_check
        %p1676 = pneg %p1675
      $region54: #{tpu_custom_call.1} parent=5 // pred_check_branch
        %1678 = sbr.rel (%p1676) target = $region56
      $region55: #{tpu_custom_call.1} parent=5 // pred_region
        %s1679 = ssub.s32 %s17, 2
        // Predicated region
        $region57: #{tpu_custom_call.1} parent=55 // pred_check
          %p1680 = pneg %p135
        $region58: #{tpu_custom_call.1} parent=55 // pred_check_branch
          %1682 = sbr.rel (%p1680) target = $region60
        $region59: #{tpu_custom_call.1} parent=55 // pred_region
          %s1683 = sand.u32 %s120, 1
          %s1684 = scalar_lea.sflag [#allocation4], %s1683
          %s1685 = sand.u32 %s120, 1
          %s1686 = smul.addr %s1685, 64
          %s1687 = scalar_lea.vmem [#allocation8], %s1686
          %1689 = dma.done %s1684, 1024
        $region60: #{tpu_custom_call.1} parent=55 // pred_fallthru
          _
      $region56: #{tpu_custom_call.1} parent=5 // pred_fallthru
        _
    $region6: #{tpu_custom_call.1} parent=1 // loop_footer
      %s21 = sadd.s32 1, %s17
    $region7: #{tpu_custom_call.1} parent=1 // loop_footer_branch
      %16 = sbr.rel target = $region3
    $region8: #{tpu_custom_call.1} parent=1 // loop_exit
      _
    %1690 = vsyncpa [#allocation3], 1
    %s1691 = scalar_lea.sflag [#allocation3], 1
    %1692 = vsyncpa %s1691, 1
    %1693 = vsyncpa [#allocation6], 1
    %1694 = vsyncpa [#allocation4], 1
    %s1695 = scalar_lea.sflag [#allocation4], 1
    %1696 = vsyncpa %s1695, 1

</llo_original>
